<compile_context>
chip_gen: v5e
topology: v5e:2x2
jax: 0.10.0
libtpu: 0.0.40
codegen_flags: <defaults>
</compile_context>

<pallas_src>
import math
import numpy as np
import jax
import jax.numpy as jnp
from jax.experimental import pallas as pl
from jax.experimental.pallas import tpu as pltpu

# ----------------------------- hyper-parameters -----------------------------
B = 2                       # batch
C_OBS = 4                   # obs channels (trivial reps)
H = W = 18                  # spatial -> 16x16 conv output (S = 256)
N_GROUP = 4                 # C4 rotation group
NUM_FILTERS = 8             # regular-rep copies in the first encoder layer
HIDDEN_DIM = 32             # == encoder_feature_dim (module asserts equality)
ACTION_DIM = 8              # action_shape[0]

KH = KW = 3
OH, OW = H - KH + 1, W - KW + 1
S = OH * OW                           # 256 conv-output positions per sample
BS = B * S                            # 512 rows with batch folded in
K1 = C_OBS * KH * KW                  # 36 im2col features
F1 = NUM_FILTERS * N_GROUP            # 32
F2 = HIDDEN_DIM * N_GROUP             # 128 (hidden_dim regular reps = encoder output)
C_CAT = F2 + (ACTION_DIM - 4) + 4     # 136 = regular + trivial(inv_act) + irrep1(dxy)
QH = 2 * HIDDEN_DIM                   # 64 fields when Q1 and Q2 heads are stacked
OUT_W = 128                           # padded lane-dense output width


# --------------------------------- kernel -----------------------------------
def critic_kernel(x_ref, w1_ref, b1_ref, w2_ref, b2_ref, pool_ref, act_ref,
                  wqf_ref, wqa_ref, bq_ref, wout_ref, bout_ref, q_ref):
    # ---- synthetic equivariant encoder, batch folded into rows ----
    # obs/255 is pre-folded into w1; x is the raw bf16 im2col matrix (BS, K1).
    h1 = jnp.maximum(
        jnp.dot(x_ref[...], w1_ref[...], preferred_element_type=jnp.float32)
        + b1_ref[...], 0.0)                                             # (BS, F1) f32
    h2 = jnp.maximum(
        jnp.dot(h1.astype(jnp.bfloat16), w2_ref[...],
                preferred_element_type=jnp.float32) + b2_ref[...], 0.0)  # (BS, F2) f32

    # per-sample global average pool as a segment matmul (MXU, not a VPU add tree)
    feat = jnp.dot(pool_ref[...], h2.astype(jnp.bfloat16),
                   preferred_element_type=jnp.float32)                   # (B, F2) f32
    feat_b = feat.astype(jnp.bfloat16)
    act = act_ref[...]                                                   # (B, A) bf16

    # ---- fused Q1/Q2 heads: 1x1 R2Conv split per group element g + ReLU,
    #      then GroupPooling == max over the N_GROUP partial results ----
    pooled = None
    for g in range(N_GROUP):
        hq = (jnp.dot(feat_b, wqf_ref[g], preferred_element_type=jnp.float32)
              + jnp.dot(act, wqa_ref[g], preferred_element_type=jnp.float32)
              + bq_ref[g])
        hq = jnp.maximum(hq, 0.0)                                        # (B, QH) f32
        pooled = hq if pooled is None else jnp.maximum(pooled, hq)       # (B, QH)

    # final 1x1 conv (trivial reps) of both critics, padded to one lane-dense
    # (B, 128) store: column 0 = q1, column 1 = q2, the rest is zero padding.
    q_ref[...] = (jnp.dot(pooled.astype(jnp.bfloat16), wout_ref[...],
                          preferred_element_type=jnp.float32) + bout_ref[...])


# --------------------------------- wrappers ----------------------------------
def _im2col(obs):
    """(B, C, H, W) -> (B*S, C*KH*KW); K ordered as (c, dy, dx); rows = b*S + s."""
    cols = []
    for c in range(C_OBS):
        for dy in range(KH):
            for dx in range(KW):
                cols.append(obs[:, c, dy:dy + OH, dx:dx + OW].reshape(B, S))
    return jnp.stack(cols, axis=-1).reshape(BS, K1)


@jax.jit
def critic_forward(obs, action, kparams):
    (w1, b1, w2, b2, pool, wqf, wqa, bq, wout, bout) = kparams
    x = _im2col(obs.astype(jnp.float32)).astype(jnp.bfloat16)   # fused by XLA with the call
    act = action.astype(jnp.bfloat16)

    vmem = lambda: pl.BlockSpec(memory_space=pltpu.MemorySpace.VMEM)
    qout = pl.pallas_call(
        critic_kernel,
        out_shape=jax.ShapeDtypeStruct((B, OUT_W), jnp.float32),
        in_specs=[vmem() for _ in range(12)],
        out_specs=vmem(),
    )(x, w1, b1, w2, b2, pool, act, wqf, wqa, bq, wout, bout)

    return qout[:, 0:1], qout[:, 1:2]                            # q1, q2 : (B, 1) each


# ------------------------- parameters (module layout) ------------------------
def init_module_params(key):
    ks = jax.random.split(key, 6)
    p = {}
    # synthetic encoder
    p['w1'] = jax.random.normal(ks[0], (K1, F1), jnp.float32) / math.sqrt(K1)
    p['b1'] = jnp.linspace(-0.1, 0.1, F1, dtype=jnp.float32)
    p['w2'] = jax.random.normal(ks[1], (F1, F2), jnp.float32) / math.sqrt(F1)
    p['b2'] = jnp.linspace(-0.05, 0.05, F2, dtype=jnp.float32)
    # Q1 / Q2 heads (1x1 R2Conv -> ReLU -> GroupPooling -> 1x1 R2Conv), module layout:
    # input channels ordered [conv_out(128), inv_act(4), dxy(4)], output channel f*N+g.
    p['wq1'] = jax.random.normal(ks[2], (C_CAT, F2), jnp.float32) / math.sqrt(C_CAT)
    p['bq1'] = jnp.linspace(-0.02, 0.02, F2, dtype=jnp.float32)
    p['wq2'] = jax.random.normal(ks[3], (C_CAT, F2), jnp.float32) / math.sqrt(C_CAT)
    p['bq2'] = jnp.linspace(-0.03, 0.03, F2, dtype=jnp.float32)
    p['wq1o'] = jax.random.normal(ks[4], (HIDDEN_DIM, 1), jnp.float32) / math.sqrt(HIDDEN_DIM)
    p['bq1o'] = jnp.float32(0.01)
    p['wq2o'] = jax.random.normal(ks[5], (HIDDEN_DIM, 1), jnp.float32) / math.sqrt(HIDDEN_DIM)
    p['bq2o'] = jnp.float32(-0.01)
    return p


def prepare_kernel_params(p):
    """One-time re-layout of module weights into the kernel-friendly layout."""
    w1 = np.asarray(p['w1']) / 255.0                 # fold obs/255 into the first conv
    b1 = np.asarray(p['b1']).reshape(1, F1)
    w2 = np.asarray(p['w2'])
    b2 = np.asarray(p['b2']).reshape(1, F2)

    # per-sample mean pooling as a (B, B*S) segment matrix
    pool = np.zeros((B, BS), np.float32)
    for b in range(B):
        pool[b, b * S:(b + 1) * S] = 1.0 / S

    # raw-action column j -> cat channel (dxy / inv_act de-interleave folded in)
    cat_idx = np.array([F2 + 4 + j // 2 if j % 2 == 0 else F2 + (j - 1) // 2
                        for j in range(ACTION_DIM)])

    wq1, wq2 = np.asarray(p['wq1']), np.asarray(p['wq2'])
    bq1, bq2 = np.asarray(p['bq1']), np.asarray(p['bq2'])
    wqf = np.zeros((N_GROUP, F2, QH), np.float32)
    wqa = np.zeros((N_GROUP, ACTION_DIM, QH), np.float32)
    bq = np.zeros((N_GROUP, 1, QH), np.float32)
    for g in range(N_GROUP):
        out_idx = np.arange(HIDDEN_DIM) * N_GROUP + g        # channels of group element g
        wqf[g, :, :HIDDEN_DIM] = wq1[:F2, out_idx]
        wqf[g, :, HIDDEN_DIM:] = wq2[:F2, out_idx]
        wqa[g, :, :HIDDEN_DIM] = wq1[cat_idx][:, out_idx]
        wqa[g, :, HIDDEN_DIM:] = wq2[cat_idx][:, out_idx]
        bq[g, 0, :HIDDEN_DIM] = bq1[out_idx]
        bq[g, 0, HIDDEN_DIM:] = bq2[out_idx]

    # final trivial 1x1 conv of both critics, zero-padded to a lane-dense 128-wide output
    wout = np.zeros((QH, OUT_W), np.float32)
    wout[:HIDDEN_DIM, 0] = np.asarray(p['wq1o'])[:, 0]
    wout[HIDDEN_DIM:, 1] = np.asarray(p['wq2o'])[:, 0]
    bout = np.zeros((1, OUT_W), np.float32)
    bout[0, 0] = float(p['bq1o'])
    bout[0, 1] = float(p['bq2o'])

    bf = jnp.bfloat16
    return (jnp.asarray(w1, bf), jnp.asarray(b1), jnp.asarray(w2, bf), jnp.asarray(b2),
            jnp.asarray(pool, bf), jnp.asarray(wqf, bf), jnp.asarray(wqa, bf),
            jnp.asarray(bq), jnp.asarray(wout, bf), jnp.asarray(bout))


# ------------------------------ pure-JAX reference ---------------------------
def critic_reference(obs, action, p):
    obs = obs.astype(jnp.float32) / 255.0
    cols = []
    for c in range(C_OBS):
        for dy in range(KH):
            for dx in range(KW):
                cols.append(obs[:, c, dy:dy + OH, dx:dx + OW].reshape(B, S))
    patches = jnp.stack(cols, axis=-1)                                   # (B, S, K1)
    h1 = jax.nn.relu(jnp.einsum('bsk,kf->bsf', patches, p['w1'], precision='highest') + p['b1'])
    h2 = jax.nn.relu(jnp.einsum('bsf,fg->bsg', h1, p['w2'], precision='highest') + p['b2'])
    conv_out = jnp.mean(h2, axis=1)                                      # (B, F2)

    dxy = action[:, 0::2]                                                # cols 0,2,4,6
    inv_act = action[:, 1::2]                                            # cols 1,3,5,7
    cat = jnp.concatenate([conv_out, inv_act, dxy], axis=1)              # (B, C_CAT)

    def q_head(wq, bq, wo, bo):
        h = jax.nn.relu(jnp.dot(cat, wq, precision='highest') + bq)      # (B, F2)
        pooled = jnp.max(h.reshape(B, HIDDEN_DIM, N_GROUP), axis=-1)     # GroupPooling
        return jnp.dot(pooled, wo, precision='highest') + bo             # (B, 1)

    q1 = q_head(p['wq1'], p['bq1'], p['wq1o'], p['bq1o'])
    q2 = q_head(p['wq2'], p['bq2'], p['wq2o'], p['bq2o'])
    return q1, q2


if __name__ == "__main__":
    key = jax.random.PRNGKey(0)
    k_obs, k_act, k_par = jax.random.split(key, 3)
    obs = jax.random.uniform(k_obs, (B, C_OBS, H, W), jnp.float32, 0.0, 255.0)
    action = jax.random.uniform(k_act, (B, ACTION_DIM), jnp.float32, -1.0, 1.0)

    params = init_module_params(k_par)
    kparams = prepare_kernel_params(params)

    q1, q2 = jax.block_until_ready(critic_forward(obs, action, kparams))
    r1, r2 = critic_reference(obs, action, params)
    # bf16 MXU operands with f32 accumulation -> relaxed tolerance vs. the f32 reference
    np.testing.assert_allclose(np.asarray(q1), np.asarray(r1), rtol=2e-2, atol=2e-2)
    np.testing.assert_allclose(np.asarray(q2), np.asarray(r2), rtol=2e-2, atol=2e-2)

    print("KERNEL_OK")
</pallas_src>

<mosaic_0001>
module attributes {stable_mosaic.version = 11 : i64} {
  func.func @critic_kernel(%arg0: memref<512x36xbf16, #tpu.memory_space<vmem>>, %arg1: memref<36x32xbf16, #tpu.memory_space<vmem>>, %arg2: memref<1x32xf32, #tpu.memory_space<vmem>>, %arg3: memref<32x128xbf16, #tpu.memory_space<vmem>>, %arg4: memref<1x128xf32, #tpu.memory_space<vmem>>, %arg5: memref<2x512xbf16, #tpu.memory_space<vmem>>, %arg6: memref<2x8xbf16, #tpu.memory_space<vmem>>, %arg7: memref<4x128x64xbf16, #tpu.memory_space<vmem>>, %arg8: memref<4x8x64xbf16, #tpu.memory_space<vmem>>, %arg9: memref<4x1x64xf32, #tpu.memory_space<vmem>>, %arg10: memref<64x128xbf16, #tpu.memory_space<vmem>>, %arg11: memref<1x128xf32, #tpu.memory_space<vmem>>, %arg12: memref<2x128xf32, #tpu.memory_space<vmem>>) attributes {dimension_semantics = [], scalar_prefetch = 0 : i64, scratch_operands = 0 : i64, tpu.core_type = #tpu.core_type<tc>} {
    %c0 = arith.constant 0 : index
    %c0_0 = arith.constant 0 : index
    %0 = vector.load %arg0[%c0, %c0_0] : memref<512x36xbf16, #tpu.memory_space<vmem>>, vector<512x36xbf16>
    %c0_1 = arith.constant 0 : index
    %c0_2 = arith.constant 0 : index
    %1 = vector.load %arg1[%c0_1, %c0_2] : memref<36x32xbf16, #tpu.memory_space<vmem>>, vector<36x32xbf16>
    %cst = arith.constant dense<0.000000e+00> : vector<512x32xf32>
    %2 = tpu.matmul %0, %1, %cst {dimension_numbers = #tpu.dot_dimension_numbers<[1], [0], [0], [1], [0, 0, 1, 1], [], []>} : vector<512x36xbf16>, vector<36x32xbf16>, vector<512x32xf32> -> vector<512x32xf32>
    %c0_3 = arith.constant 0 : index
    %c0_4 = arith.constant 0 : index
    %3 = vector.load %arg2[%c0_3, %c0_4] : memref<1x32xf32, #tpu.memory_space<vmem>>, vector<1x32xf32>
    %4 = vector.broadcast %3 : vector<1x32xf32> to vector<512x32xf32>
    %5 = arith.addf %2, %4 : vector<512x32xf32>
    %cst_5 = arith.constant 0.000000e+00 : f32
    %6 = vector.broadcast %cst_5 : f32 to vector<512x32xf32>
    %7 = arith.maximumf %5, %6 : vector<512x32xf32>
    %8 = arith.truncf %7 : vector<512x32xf32> to vector<512x32xbf16>
    %c0_6 = arith.constant 0 : index
    %c0_7 = arith.constant 0 : index
    %9 = vector.load %arg3[%c0_6, %c0_7] : memref<32x128xbf16, #tpu.memory_space<vmem>>, vector<32x128xbf16>
    %cst_8 = arith.constant dense<0.000000e+00> : vector<512x128xf32>
    %10 = tpu.matmul %8, %9, %cst_8 {dimension_numbers = #tpu.dot_dimension_numbers<[1], [0], [0], [1], [0, 0, 1, 1], [], []>} : vector<512x32xbf16>, vector<32x128xbf16>, vector<512x128xf32> -> vector<512x128xf32>
    %c0_9 = arith.constant 0 : index
    %c0_10 = arith.constant 0 : index
    %11 = vector.load %arg4[%c0_9, %c0_10] : memref<1x128xf32, #tpu.memory_space<vmem>>, vector<1x128xf32>
    %12 = vector.broadcast %11 : vector<1x128xf32> to vector<512x128xf32>
    %13 = arith.addf %10, %12 : vector<512x128xf32>
    %cst_11 = arith.constant 0.000000e+00 : f32
    %14 = vector.broadcast %cst_11 : f32 to vector<512x128xf32>
    %15 = arith.maximumf %13, %14 : vector<512x128xf32>
    %c0_12 = arith.constant 0 : index
    %c0_13 = arith.constant 0 : index
    %16 = vector.load %arg5[%c0_12, %c0_13] : memref<2x512xbf16, #tpu.memory_space<vmem>>, vector<2x512xbf16>
    %17 = arith.truncf %15 : vector<512x128xf32> to vector<512x128xbf16>
    %cst_14 = arith.constant dense<0.000000e+00> : vector<2x128xf32>
    %18 = tpu.matmul %16, %17, %cst_14 {dimension_numbers = #tpu.dot_dimension_numbers<[1], [0], [0], [1], [0, 0, 1, 1], [], []>} : vector<2x512xbf16>, vector<512x128xbf16>, vector<2x128xf32> -> vector<2x128xf32>
    %19 = arith.truncf %18 : vector<2x128xf32> to vector<2x128xbf16>
    %c0_15 = arith.constant 0 : index
    %c0_16 = arith.constant 0 : index
    %20 = vector.load %arg6[%c0_15, %c0_16] : memref<2x8xbf16, #tpu.memory_space<vmem>>, vector<2x8xbf16>
    %c0_17 = arith.constant 0 : index
    %c0_18 = arith.constant 0 : index
    %c0_19 = arith.constant 0 : index
    %21 = vector.load %arg7[%c0_17, %c0_18, %c0_19] : memref<4x128x64xbf16, #tpu.memory_space<vmem>>, vector<1x128x64xbf16>
    %22 = vector.shape_cast %21 : vector<1x128x64xbf16> to vector<128x64xbf16>
    %cst_20 = arith.constant dense<0.000000e+00> : vector<2x64xf32>
    %23 = tpu.matmul %19, %22, %cst_20 {dimension_numbers = #tpu.dot_dimension_numbers<[1], [0], [0], [1], [0, 0, 1, 1], [], []>} : vector<2x128xbf16>, vector<128x64xbf16>, vector<2x64xf32> -> vector<2x64xf32>
    %c0_21 = arith.constant 0 : index
    %c0_22 = arith.constant 0 : index
    %c0_23 = arith.constant 0 : index
    %24 = vector.load %arg8[%c0_21, %c0_22, %c0_23] : memref<4x8x64xbf16, #tpu.memory_space<vmem>>, vector<1x8x64xbf16>
    %25 = vector.shape_cast %24 : vector<1x8x64xbf16> to vector<8x64xbf16>
    %cst_24 = arith.constant dense<0.000000e+00> : vector<2x64xf32>
    %26 = tpu.matmul %20, %25, %cst_24 {dimension_numbers = #tpu.dot_dimension_numbers<[1], [0], [0], [1], [0, 0, 1, 1], [], []>} : vector<2x8xbf16>, vector<8x64xbf16>, vector<2x64xf32> -> vector<2x64xf32>
    %27 = arith.addf %23, %26 : vector<2x64xf32>
    %c0_25 = arith.constant 0 : index
    %c0_26 = arith.constant 0 : index
    %c0_27 = arith.constant 0 : index
    %28 = vector.load %arg9[%c0_25, %c0_26, %c0_27] : memref<4x1x64xf32, #tpu.memory_space<vmem>>, vector<1x1x64xf32>
    %29 = vector.shape_cast %28 : vector<1x1x64xf32> to vector<1x64xf32>
    %30 = vector.broadcast %29 : vector<1x64xf32> to vector<2x64xf32>
    %31 = arith.addf %27, %30 : vector<2x64xf32>
    %cst_28 = arith.constant 0.000000e+00 : f32
    %32 = vector.broadcast %cst_28 : f32 to vector<2x64xf32>
    %33 = arith.maximumf %31, %32 : vector<2x64xf32>
    %c1 = arith.constant 1 : index
    %c0_29 = arith.constant 0 : index
    %c0_30 = arith.constant 0 : index
    %34 = vector.load %arg7[%c1, %c0_29, %c0_30] : memref<4x128x64xbf16, #tpu.memory_space<vmem>>, vector<1x128x64xbf16>
    %35 = vector.shape_cast %34 : vector<1x128x64xbf16> to vector<128x64xbf16>
    %cst_31 = arith.constant dense<0.000000e+00> : vector<2x64xf32>
    %36 = tpu.matmul %19, %35, %cst_31 {dimension_numbers = #tpu.dot_dimension_numbers<[1], [0], [0], [1], [0, 0, 1, 1], [], []>} : vector<2x128xbf16>, vector<128x64xbf16>, vector<2x64xf32> -> vector<2x64xf32>
    %c1_32 = arith.constant 1 : index
    %c0_33 = arith.constant 0 : index
    %c0_34 = arith.constant 0 : index
    %37 = vector.load %arg8[%c1_32, %c0_33, %c0_34] : memref<4x8x64xbf16, #tpu.memory_space<vmem>>, vector<1x8x64xbf16>
    %38 = vector.shape_cast %37 : vector<1x8x64xbf16> to vector<8x64xbf16>
    %cst_35 = arith.constant dense<0.000000e+00> : vector<2x64xf32>
    %39 = tpu.matmul %20, %38, %cst_35 {dimension_numbers = #tpu.dot_dimension_numbers<[1], [0], [0], [1], [0, 0, 1, 1], [], []>} : vector<2x8xbf16>, vector<8x64xbf16>, vector<2x64xf32> -> vector<2x64xf32>
    %40 = arith.addf %36, %39 : vector<2x64xf32>
    %c1_36 = arith.constant 1 : index
    %c0_37 = arith.constant 0 : index
    %c0_38 = arith.constant 0 : index
    %41 = vector.load %arg9[%c1_36, %c0_37, %c0_38] : memref<4x1x64xf32, #tpu.memory_space<vmem>>, vector<1x1x64xf32>
    %42 = vector.shape_cast %41 : vector<1x1x64xf32> to vector<1x64xf32>
    %43 = vector.broadcast %42 : vector<1x64xf32> to vector<2x64xf32>
    %44 = arith.addf %40, %43 : vector<2x64xf32>
    %cst_39 = arith.constant 0.000000e+00 : f32
    %45 = vector.broadcast %cst_39 : f32 to vector<2x64xf32>
    %46 = arith.maximumf %44, %45 : vector<2x64xf32>
    %47 = arith.maximumf %33, %46 : vector<2x64xf32>
    %c2 = arith.constant 2 : index
    %c0_40 = arith.constant 0 : index
    %c0_41 = arith.constant 0 : index
    %48 = vector.load %arg7[%c2, %c0_40, %c0_41] : memref<4x128x64xbf16, #tpu.memory_space<vmem>>, vector<1x128x64xbf16>
    %49 = vector.shape_cast %48 : vector<1x128x64xbf16> to vector<128x64xbf16>
    %cst_42 = arith.constant dense<0.000000e+00> : vector<2x64xf32>
    %50 = tpu.matmul %19, %49, %cst_42 {dimension_numbers = #tpu.dot_dimension_numbers<[1], [0], [0], [1], [0, 0, 1, 1], [], []>} : vector<2x128xbf16>, vector<128x64xbf16>, vector<2x64xf32> -> vector<2x64xf32>
    %c2_43 = arith.constant 2 : index
    %c0_44 = arith.constant 0 : index
    %c0_45 = arith.constant 0 : index
    %51 = vector.load %arg8[%c2_43, %c0_44, %c0_45] : memref<4x8x64xbf16, #tpu.memory_space<vmem>>, vector<1x8x64xbf16>
    %52 = vector.shape_cast %51 : vector<1x8x64xbf16> to vector<8x64xbf16>
    %cst_46 = arith.constant dense<0.000000e+00> : vector<2x64xf32>
    %53 = tpu.matmul %20, %52, %cst_46 {dimension_numbers = #tpu.dot_dimension_numbers<[1], [0], [0], [1], [0, 0, 1, 1], [], []>} : vector<2x8xbf16>, vector<8x64xbf16>, vector<2x64xf32> -> vector<2x64xf32>
    %54 = arith.addf %50, %53 : vector<2x64xf32>
    %c2_47 = arith.constant 2 : index
    %c0_48 = arith.constant 0 : index
    %c0_49 = arith.constant 0 : index
    %55 = vector.load %arg9[%c2_47, %c0_48, %c0_49] : memref<4x1x64xf32, #tpu.memory_space<vmem>>, vector<1x1x64xf32>
    %56 = vector.shape_cast %55 : vector<1x1x64xf32> to vector<1x64xf32>
    %57 = vector.broadcast %56 : vector<1x64xf32> to vector<2x64xf32>
    %58 = arith.addf %54, %57 : vector<2x64xf32>
    %cst_50 = arith.constant 0.000000e+00 : f32
    %59 = vector.broadcast %cst_50 : f32 to vector<2x64xf32>
    %60 = arith.maximumf %58, %59 : vector<2x64xf32>
    %61 = arith.maximumf %47, %60 : vector<2x64xf32>
    %c3 = arith.constant 3 : index
    %c0_51 = arith.constant 0 : index
    %c0_52 = arith.constant 0 : index
    %62 = vector.load %arg7[%c3, %c0_51, %c0_52] : memref<4x128x64xbf16, #tpu.memory_space<vmem>>, vector<1x128x64xbf16>
    %63 = vector.shape_cast %62 : vector<1x128x64xbf16> to vector<128x64xbf16>
    %cst_53 = arith.constant dense<0.000000e+00> : vector<2x64xf32>
    %64 = tpu.matmul %19, %63, %cst_53 {dimension_numbers = #tpu.dot_dimension_numbers<[1], [0], [0], [1], [0, 0, 1, 1], [], []>} : vector<2x128xbf16>, vector<128x64xbf16>, vector<2x64xf32> -> vector<2x64xf32>
    %c3_54 = arith.constant 3 : index
    %c0_55 = arith.constant 0 : index
    %c0_56 = arith.constant 0 : index
    %65 = vector.load %arg8[%c3_54, %c0_55, %c0_56] : memref<4x8x64xbf16, #tpu.memory_space<vmem>>, vector<1x8x64xbf16>
    %66 = vector.shape_cast %65 : vector<1x8x64xbf16> to vector<8x64xbf16>
    %cst_57 = arith.constant dense<0.000000e+00> : vector<2x64xf32>
    %67 = tpu.matmul %20, %66, %cst_57 {dimension_numbers = #tpu.dot_dimension_numbers<[1], [0], [0], [1], [0, 0, 1, 1], [], []>} : vector<2x8xbf16>, vector<8x64xbf16>, vector<2x64xf32> -> vector<2x64xf32>
    %68 = arith.addf %64, %67 : vector<2x64xf32>
    %c3_58 = arith.constant 3 : index
    %c0_59 = arith.constant 0 : index
    %c0_60 = arith.constant 0 : index
    %69 = vector.load %arg9[%c3_58, %c0_59, %c0_60] : memref<4x1x64xf32, #tpu.memory_space<vmem>>, vector<1x1x64xf32>
    %70 = vector.shape_cast %69 : vector<1x1x64xf32> to vector<1x64xf32>
    %71 = vector.broadcast %70 : vector<1x64xf32> to vector<2x64xf32>
    %72 = arith.addf %68, %71 : vector<2x64xf32>
    %cst_61 = arith.constant 0.000000e+00 : f32
    %73 = vector.broadcast %cst_61 : f32 to vector<2x64xf32>
    %74 = arith.maximumf %72, %73 : vector<2x64xf32>
    %75 = arith.maximumf %61, %74 : vector<2x64xf32>
    %76 = arith.truncf %75 : vector<2x64xf32> to vector<2x64xbf16>
    %c0_62 = arith.constant 0 : index
    %c0_63 = arith.constant 0 : index
    %77 = vector.load %arg10[%c0_62, %c0_63] : memref<64x128xbf16, #tpu.memory_space<vmem>>, vector<64x128xbf16>
    %cst_64 = arith.constant dense<0.000000e+00> : vector<2x128xf32>
    %78 = tpu.matmul %76, %77, %cst_64 {dimension_numbers = #tpu.dot_dimension_numbers<[1], [0], [0], [1], [0, 0, 1, 1], [], []>} : vector<2x64xbf16>, vector<64x128xbf16>, vector<2x128xf32> -> vector<2x128xf32>
    %c0_65 = arith.constant 0 : index
    %c0_66 = arith.constant 0 : index
    %79 = vector.load %arg11[%c0_65, %c0_66] : memref<1x128xf32, #tpu.memory_space<vmem>>, vector<1x128xf32>
    %80 = vector.broadcast %79 : vector<1x128xf32> to vector<2x128xf32>
    %81 = arith.addf %78, %80 : vector<2x128xf32>
    %c0_67 = arith.constant 0 : index
    %c0_68 = arith.constant 0 : index
    %82 = vector.load %arg12[%c0_67, %c0_68] : memref<2x128xf32, #tpu.memory_space<vmem>>, vector<2x128xf32>
    tpu.vector_store %arg12[%c0_67, %c0_68], %81 {strides = array<i32>} : memref<2x128xf32, #tpu.memory_space<vmem>>, vector<2x128xf32>,
    return
  }
}

</mosaic_0001>

<llo_original>
// kernel: critic_forward.1
$region0: #{critic_forward.1}
  #allocation0 [shape = 'u32[]', space=smem, size = 0x4, offset = 0x4, fixed_abs, tag = 'smem constant byte address 0x4 - core index']
  #allocation1 [shape = 'u32[72,128]{1,0:T(1,128)}', space=vmem, size = 0x9000, scoped, tag = 'internal scratch']
  %s0 = inlined_call_operand.vmem [shape: bf16[512,36], index: 0, kind: input, shape index: {}]
  %s1 = inlined_call_operand.vmem [shape: bf16[36,32], index: 1, kind: input, shape index: {}]
  %s2 = inlined_call_operand.vmem [shape: f32[1,32], index: 2, kind: input, shape index: {}]
  %s3 = inlined_call_operand.vmem [shape: bf16[32,128], index: 3, kind: input, shape index: {}]
  %s4 = inlined_call_operand.vmem [shape: f32[1,128], index: 4, kind: input, shape index: {}]
  %s5 = inlined_call_operand.vmem [shape: bf16[2,512], index: 5, kind: input, shape index: {}]
  %s6 = inlined_call_operand.vmem [shape: bf16[2,8], index: 6, kind: input, shape index: {}]
  %s7 = inlined_call_operand.vmem [shape: bf16[4,128,64], index: 7, kind: input, shape index: {}]
  %s8 = inlined_call_operand.vmem [shape: bf16[4,8,64], index: 8, kind: input, shape index: {}]
  %s9 = inlined_call_operand.vmem [shape: f32[4,1,64], index: 9, kind: input, shape index: {}]
  %s10 = inlined_call_operand.vmem [shape: bf16[64,128], index: 10, kind: input, shape index: {}]
  %s11 = inlined_call_operand.vmem [shape: f32[1,128], index: 11, kind: input, shape index: {}]
  %s12 = inlined_call_operand.vmem [shape: f32[2,128], index: 12, kind: output, shape index: {}]
  %s13 = sld [smem:[#allocation0]]
  $region58: #{critic_forward.1} parent=0
    _
  %s15 = ssub.s32 1, %s13
  %s16 = scalar_select 0, %s15, %s13
  // Predicated region
  $region2: #{critic_forward.1} parent=0 // pred_check
    _
  $region3: #{critic_forward.1} parent=0 // pred_check_branch
    %18 = sbr.rel (0) target = $region5
  $region4: #{critic_forward.1} parent=0 // pred_region
    _
  $region5: #{critic_forward.1} parent=0 // pred_fallthru
    _
  // Predicated region
  $region6: #{critic_forward.1} parent=0 // pred_check
    _
  $region7: #{critic_forward.1} parent=0 // pred_check_branch
    %20 = sbr.rel (0) target = $region9
  $region8: #{critic_forward.1} parent=0 // pred_region
    _
  $region9: #{critic_forward.1} parent=0 // pred_fallthru
    _
  // Predicated region
  $region10: #{critic_forward.1} parent=0 // pred_check
    _
  $region11: #{critic_forward.1} parent=0 // pred_check_branch
    %22 = sbr.rel (0) target = $region13
  $region12: #{critic_forward.1} parent=0 // pred_region
    _
  $region13: #{critic_forward.1} parent=0 // pred_fallthru
    _
  // Predicated region
  $region14: #{critic_forward.1} parent=0 // pred_check
    _
  $region15: #{critic_forward.1} parent=0 // pred_check_branch
    %24 = sbr.rel (0) target = $region17
  $region16: #{critic_forward.1} parent=0 // pred_region
    _
  $region17: #{critic_forward.1} parent=0 // pred_fallthru
    _
  // Predicated region
  $region18: #{critic_forward.1} parent=0 // pred_check
    _
  $region19: #{critic_forward.1} parent=0 // pred_check_branch
    %26 = sbr.rel (0) target = $region21
  $region20: #{critic_forward.1} parent=0 // pred_region
    _
  $region21: #{critic_forward.1} parent=0 // pred_fallthru
    _
  // Predicated region
  $region22: #{critic_forward.1} parent=0 // pred_check
    _
  $region23: #{critic_forward.1} parent=0 // pred_check_branch
    %28 = sbr.rel (0) target = $region25
  $region24: #{critic_forward.1} parent=0 // pred_region
    _
  $region25: #{critic_forward.1} parent=0 // pred_fallthru
    _
  // Predicated region
  $region26: #{critic_forward.1} parent=0 // pred_check
    _
  $region27: #{critic_forward.1} parent=0 // pred_check_branch
    %30 = sbr.rel (0) target = $region29
  $region28: #{critic_forward.1} parent=0 // pred_region
    _
  $region29: #{critic_forward.1} parent=0 // pred_fallthru
    _
  // Predicated region
  $region30: #{critic_forward.1} parent=0 // pred_check
    _
  $region31: #{critic_forward.1} parent=0 // pred_check_branch
    %32 = sbr.rel (0) target = $region33
  $region32: #{critic_forward.1} parent=0 // pred_region
    _
  $region33: #{critic_forward.1} parent=0 // pred_fallthru
    _
  // Predicated region
  $region34: #{critic_forward.1} parent=0 // pred_check
    _
  $region35: #{critic_forward.1} parent=0 // pred_check_branch
    %34 = sbr.rel (0) target = $region37
  $region36: #{critic_forward.1} parent=0 // pred_region
    _
  $region37: #{critic_forward.1} parent=0 // pred_fallthru
    _
  // Predicated region
  $region38: #{critic_forward.1} parent=0 // pred_check
    _
  $region39: #{critic_forward.1} parent=0 // pred_check_branch
    %36 = sbr.rel (0) target = $region41
  $region40: #{critic_forward.1} parent=0 // pred_region
    _
  $region41: #{critic_forward.1} parent=0 // pred_fallthru
    _
  // Predicated region
  $region42: #{critic_forward.1} parent=0 // pred_check
    _
  $region43: #{critic_forward.1} parent=0 // pred_check_branch
    %38 = sbr.rel (0) target = $region45
  $region44: #{critic_forward.1} parent=0 // pred_region
    _
  $region45: #{critic_forward.1} parent=0 // pred_fallthru
    _
  // Predicated region
  $region46: #{critic_forward.1} parent=0 // pred_check
    _
  $region47: #{critic_forward.1} parent=0 // pred_check_branch
    %40 = sbr.rel (0) target = $region49
  $region48: #{critic_forward.1} parent=0 // pred_region
    _
  $region49: #{critic_forward.1} parent=0 // pred_fallthru
    _
  %v42 = vld [vmem:[%s0] sm:$0xf]
  %v43 = vld [vmem:[%s0 + $0x4] sm:$0xf]
  %v44 = vld [vmem:[%s0 + $0x8] sm:$0xf]
  %v45 = vld [vmem:[%s0 + $0xc] sm:$0xf]
  %v46 = vld [vmem:[%s0 + $0x10] sm:$0xf]
  %v47 = vld [vmem:[%s0 + $0x14] sm:$0xf]
  %v48 = vld [vmem:[%s0 + $0x18] sm:$0xf]
  %v49 = vld [vmem:[%s0 + $0x1c] sm:$0xf]
  %v50 = vld [vmem:[%s0 + $0x20] sm:$0xf]
  %v51 = vld [vmem:[%s0 + $0x24] sm:$0xf]
  %v52 = vld [vmem:[%s0 + $0x28] sm:$0xf]
  %v53 = vld [vmem:[%s0 + $0x2c] sm:$0xf]
  %v54 = vld [vmem:[%s0 + $0x30] sm:$0xf]
  %v55 = vld [vmem:[%s0 + $0x34] sm:$0xf]
  %v56 = vld [vmem:[%s0 + $0x38] sm:$0xf]
  %v57 = vld [vmem:[%s0 + $0x3c] sm:$0xf]
  %v58 = vld [vmem:[%s0 + $0x40] sm:$0xf]
  %v59 = vld [vmem:[%s0 + $0x44] sm:$0xf]
  %v60 = vld [vmem:[%s0 + $0x48] sm:$0xf]
  %v61 = vld [vmem:[%s0 + $0x4c] sm:$0xf]
  %v62 = vld [vmem:[%s0 + $0x50] sm:$0xf]
  %v63 = vld [vmem:[%s0 + $0x54] sm:$0xf]
  %v64 = vld [vmem:[%s0 + $0x58] sm:$0xf]
  %v65 = vld [vmem:[%s0 + $0x5c] sm:$0xf]
  %v66 = vld [vmem:[%s0 + $0x60] sm:$0xf]
  %v67 = vld [vmem:[%s0 + $0x64] sm:$0xf]
  %v68 = vld [vmem:[%s0 + $0x68] sm:$0xf]
  %v69 = vld [vmem:[%s0 + $0x6c] sm:$0xf]
  %v70 = vld [vmem:[%s0 + $0x70] sm:$0xf]
  %v71 = vld [vmem:[%s0 + $0x74] sm:$0xf]
  %v72 = vld [vmem:[%s0 + $0x78] sm:$0xf]
  %v73 = vld [vmem:[%s0 + $0x7c] sm:$0xf]
  %v74 = vld [vmem:[%s0 + $0x80] sm:$0xf]
  %v75 = vld [vmem:[%s0 + $0x84] sm:$0xf]
  %v76 = vld [vmem:[%s0 + $0x88] sm:$0xf]
  %v77 = vld [vmem:[%s0 + $0x8c] sm:$0xf]
  %v78 = vld [vmem:[%s0 + $0x90] sm:$0xf]
  %v79 = vld [vmem:[%s0 + $0x94] sm:$0xf]
  %v80 = vld [vmem:[%s0 + $0x98] sm:$0xf]
  %v81 = vld [vmem:[%s0 + $0x9c] sm:$0xf]
  %v82 = vld [vmem:[%s0 + $0xa0] sm:$0xf]
  %v83 = vld [vmem:[%s0 + $0xa4] sm:$0xf]
  %v84 = vld [vmem:[%s0 + $0xa8] sm:$0xf]
  %v85 = vld [vmem:[%s0 + $0xac] sm:$0xf]
  %v86 = vld [vmem:[%s0 + $0xb0] sm:$0xf]
  %v87 = vld [vmem:[%s0 + $0xb4] sm:$0xf]
  %v88 = vld [vmem:[%s0 + $0xb8] sm:$0xf]
  %v89 = vld [vmem:[%s0 + $0xbc] sm:$0xf]
  %v90 = vld [vmem:[%s0 + $0xc0] sm:$0xf]
  %v91 = vld [vmem:[%s0 + $0xc4] sm:$0xf]
  %v92 = vld [vmem:[%s0 + $0xc8] sm:$0xf]
  %v93 = vld [vmem:[%s0 + $0xcc] sm:$0xf]
  %v94 = vld [vmem:[%s0 + $0xd0] sm:$0xf]
  %v95 = vld [vmem:[%s0 + $0xd4] sm:$0xf]
  %v96 = vld [vmem:[%s0 + $0xd8] sm:$0xf]
  %v97 = vld [vmem:[%s0 + $0xdc] sm:$0xf]
  %v98 = vld [vmem:[%s0 + $0xe0] sm:$0xf]
  %v99 = vld [vmem:[%s0 + $0xe4] sm:$0xf]
  %v100 = vld [vmem:[%s0 + $0xe8] sm:$0xf]
  %v101 = vld [vmem:[%s0 + $0xec] sm:$0xf]
  %v102 = vld [vmem:[%s0 + $0xf0] sm:$0xf]
  %v103 = vld [vmem:[%s0 + $0xf4] sm:$0xf]
  %v104 = vld [vmem:[%s0 + $0xf8] sm:$0xf]
  %v105 = vld [vmem:[%s0 + $0xfc] sm:$0xf]
  %v106 = vld [vmem:[%s1] sm:$0xf]
  %v107 = vld [vmem:[%s1 + $0x4] sm:$0xf]
  %v108 = vld [vmem:[%s1 + $0x8] sm:$0xf]
  %v109 = vld [vmem:[%s1 + $0xc] sm:$0xf]
  %v110 = vld [vmem:[%s1 + $0x10] sm:$0x3]
  %v111 = vld [vmem:[%s2] sm:$0x1]
  %v113 = vperm.slane %v111, 0
  %v179 = vunpack.c.l.b16 %v42
  %v180 = vunpack.c.l.b16 %v43
  %v181 = vunpack.c.l.b16 %v44
  %v182 = vunpack.c.l.b16 %v45
  %v183 = vunpack.c.l.b16 %v46
  %v184 = vunpack.c.l.b16 %v47
  %v185 = vunpack.c.l.b16 %v48
  %v186 = vunpack.c.l.b16 %v49
  %v187 = vunpack.c.l.b16 %v50
  %v188 = vunpack.c.l.b16 %v51
  %v189 = vunpack.c.l.b16 %v52
  %v190 = vunpack.c.l.b16 %v53
  %v191 = vunpack.c.l.b16 %v54
  %v192 = vunpack.c.l.b16 %v55
  %v193 = vunpack.c.l.b16 %v56
  %v194 = vunpack.c.l.b16 %v57
  %v195 = vunpack.c.l.b16 %v58
  %v196 = vunpack.c.l.b16 %v59
  %v197 = vunpack.c.l.b16 %v60
  %v198 = vunpack.c.l.b16 %v61
  %v199 = vunpack.c.l.b16 %v62
  %v200 = vunpack.c.l.b16 %v63
  %v201 = vunpack.c.l.b16 %v64
  %v202 = vunpack.c.l.b16 %v65
  %v203 = vunpack.c.l.b16 %v66
  %v204 = vunpack.c.l.b16 %v67
  %v205 = vunpack.c.l.b16 %v68
  %v206 = vunpack.c.l.b16 %v69
  %v207 = vunpack.c.l.b16 %v70
  %v208 = vunpack.c.l.b16 %v71
  %v209 = vunpack.c.l.b16 %v72
  %v210 = vunpack.c.l.b16 %v73
  %v211 = vunpack.c.l.b16 %v74
  %v212 = vunpack.c.l.b16 %v75
  %v213 = vunpack.c.l.b16 %v76
  %v214 = vunpack.c.l.b16 %v77
  %v215 = vunpack.c.l.b16 %v78
  %v216 = vunpack.c.l.b16 %v79
  %v217 = vunpack.c.l.b16 %v80
  %v218 = vunpack.c.l.b16 %v81
  %v219 = vunpack.c.l.b16 %v82
  %v220 = vunpack.c.l.b16 %v83
  %v221 = vunpack.c.l.b16 %v84
  %v222 = vunpack.c.l.b16 %v85
  %v223 = vunpack.c.l.b16 %v86
  %v224 = vunpack.c.l.b16 %v87
  %v225 = vunpack.c.l.b16 %v88
  %v226 = vunpack.c.l.b16 %v89
  %v227 = vunpack.c.l.b16 %v90
  %v228 = vunpack.c.l.b16 %v91
  %v229 = vunpack.c.l.b16 %v92
  %v230 = vunpack.c.l.b16 %v93
  %v231 = vunpack.c.l.b16 %v94
  %v232 = vunpack.c.l.b16 %v95
  %v233 = vunpack.c.l.b16 %v96
  %v234 = vunpack.c.l.b16 %v97
  %v235 = vunpack.c.l.b16 %v98
  %v236 = vunpack.c.l.b16 %v99
  %v237 = vunpack.c.l.b16 %v100
  %v238 = vunpack.c.l.b16 %v101
  %v239 = vunpack.c.l.b16 %v102
  %v240 = vunpack.c.l.b16 %v103
  %v241 = vunpack.c.l.b16 %v104
  %v242 = vunpack.c.l.b16 %v105
  %v243 = vpack.c.b16 %v180, %v179
  %v244 = vpack.c.b16 %v182, %v181
  %v245 = vpack.c.b16 %v184, %v183
  %v246 = vpack.c.b16 %v186, %v185
  %v247 = vpack.c.b16 %v188, %v187
  %v248 = vpack.c.b16 %v190, %v189
  %v249 = vpack.c.b16 %v192, %v191
  %v250 = vpack.c.b16 %v194, %v193
  %v251 = vpack.c.b16 %v196, %v195
  %v252 = vpack.c.b16 %v198, %v197
  %v253 = vpack.c.b16 %v200, %v199
  %v254 = vpack.c.b16 %v202, %v201
  %v255 = vpack.c.b16 %v204, %v203
  %v256 = vpack.c.b16 %v206, %v205
  %v257 = vpack.c.b16 %v208, %v207
  %v258 = vpack.c.b16 %v210, %v209
  %v259 = vpack.c.b16 %v212, %v211
  %v260 = vpack.c.b16 %v214, %v213
  %v261 = vpack.c.b16 %v216, %v215
  %v262 = vpack.c.b16 %v218, %v217
  %v263 = vpack.c.b16 %v220, %v219
  %v264 = vpack.c.b16 %v222, %v221
  %v265 = vpack.c.b16 %v224, %v223
  %v266 = vpack.c.b16 %v226, %v225
  %v267 = vpack.c.b16 %v228, %v227
  %v268 = vpack.c.b16 %v230, %v229
  %v269 = vpack.c.b16 %v232, %v231
  %v270 = vpack.c.b16 %v234, %v233
  %v271 = vpack.c.b16 %v236, %v235
  %v272 = vpack.c.b16 %v238, %v237
  %v273 = vpack.c.b16 %v240, %v239
  %v274 = vpack.c.b16 %v242, %v241
  %v280 = vunpack.c.l.b16 %v106
  %v281 = vunpack.c.l.b16 %v107
  %v282 = vunpack.c.l.b16 %v108
  %v283 = vunpack.c.l.b16 %v109
  %v284 = vunpack.c.l.b16 %v110
  %v285 = vpack.c.b16 %v281, %v280
  %v286 = vpack.c.b16 %v283, %v282
  %v287 = vpack.c.b16 %v284, %v284
  %vm290 = vcmask 293888
  %v292 = vsel %vm290, %v243, 0
  %v295 = vsel %vm290, %v244, 0
  %v298 = vsel %vm290, %v245, 0
  %v301 = vsel %vm290, %v246, 0
  %v304 = vsel %vm290, %v247, 0
  %v307 = vsel %vm290, %v248, 0
  %v310 = vsel %vm290, %v249, 0
  %v313 = vsel %vm290, %v250, 0
  %v316 = vsel %vm290, %v251, 0
  %v319 = vsel %vm290, %v252, 0
  %v322 = vsel %vm290, %v253, 0
  %v325 = vsel %vm290, %v254, 0
  %v328 = vsel %vm290, %v255, 0
  %v331 = vsel %vm290, %v256, 0
  %v334 = vsel %vm290, %v257, 0
  %v337 = vsel %vm290, %v258, 0
  %v340 = vsel %vm290, %v259, 0
  %v343 = vsel %vm290, %v260, 0
  %v346 = vsel %vm290, %v261, 0
  %v349 = vsel %vm290, %v262, 0
  %v352 = vsel %vm290, %v263, 0
  %v355 = vsel %vm290, %v264, 0
  %v358 = vsel %vm290, %v265, 0
  %v361 = vsel %vm290, %v266, 0
  %v364 = vsel %vm290, %v267, 0
  %v367 = vsel %vm290, %v268, 0
  %v370 = vsel %vm290, %v269, 0
  %v373 = vsel %vm290, %v270, 0
  %v376 = vsel %vm290, %v271, 0
  %v379 = vsel %vm290, %v272, 0
  %v382 = vsel %vm290, %v273, 0
  %v385 = vsel %vm290, %v274, 0
  %vm387 = vcmask 1041408
  %v389 = vsel %vm387, %v287, 0
  %391 = vmatpush.bf16.msra.mxu0 0
  %392 = vmatpush.bf16.msra.mxu0 0
  %393 = vmatpush.bf16.msra.mxu0 0
  %394 = vmatpush.bf16.msra.mxu0 0
  %395 = vmatpush.bf16.msra.mxu0 0
  %396 = vmatpush.bf16.msra.mxu0 %v389
  %397 = vmatpush.bf16.msra.mxu0 %v286
  %398 = vmatpush.bf16.msra.mxu0 %v285
  %399 = vmatmul.bf16.gmra.mxu0 %v292
  %v400 = vpop.f32.mrf.mxu0
  %v401 = vadd.f32 %v113, %v400
  %v402 = vpop.f32.mrf.mxu0
  %v403 = vadd.f32 %v113, %v402
  %404 = vmatmul.bf16.gmra.mxu0 %v295
  %v405 = vpop.f32.mrf.mxu0
  %v406 = vadd.f32 %v113, %v405
  %v407 = vpop.f32.mrf.mxu0
  %v408 = vadd.f32 %v113, %v407
  %409 = vmatmul.bf16.gmra.mxu0 %v298
  %v410 = vpop.f32.mrf.mxu0
  %v411 = vadd.f32 %v113, %v410
  %v412 = vpop.f32.mrf.mxu0
  %v413 = vadd.f32 %v113, %v412
  %414 = vmatmul.bf16.gmra.mxu0 %v301
  %v415 = vpop.f32.mrf.mxu0
  %v416 = vadd.f32 %v113, %v415
  %v417 = vpop.f32.mrf.mxu0
  %v418 = vadd.f32 %v113, %v417
  %419 = vmatmul.bf16.gmra.mxu0 %v304
  %v420 = vpop.f32.mrf.mxu0
  %v421 = vadd.f32 %v113, %v420
  %v422 = vpop.f32.mrf.mxu0
  %v423 = vadd.f32 %v113, %v422
  %424 = vmatmul.bf16.gmra.mxu0 %v307
  %v425 = vpop.f32.mrf.mxu0
  %v426 = vadd.f32 %v113, %v425
  %v427 = vpop.f32.mrf.mxu0
  %v428 = vadd.f32 %v113, %v427
  %429 = vmatmul.bf16.gmra.mxu0 %v310
  %v430 = vpop.f32.mrf.mxu0
  %v431 = vadd.f32 %v113, %v430
  %v432 = vpop.f32.mrf.mxu0
  %v433 = vadd.f32 %v113, %v432
  %434 = vmatmul.bf16.gmra.mxu0 %v313
  %v435 = vpop.f32.mrf.mxu0
  %v436 = vadd.f32 %v113, %v435
  %v437 = vpop.f32.mrf.mxu0
  %v438 = vadd.f32 %v113, %v437
  %439 = vmatmul.bf16.gmra.mxu0 %v316
  %v440 = vpop.f32.mrf.mxu0
  %v441 = vadd.f32 %v113, %v440
  %v442 = vpop.f32.mrf.mxu0
  %v443 = vadd.f32 %v113, %v442
  %444 = vmatmul.bf16.gmra.mxu0 %v319
  %v445 = vpop.f32.mrf.mxu0
  %v446 = vadd.f32 %v113, %v445
  %v447 = vpop.f32.mrf.mxu0
  %v448 = vadd.f32 %v113, %v447
  %449 = vmatmul.bf16.gmra.mxu0 %v322
  %v450 = vpop.f32.mrf.mxu0
  %v451 = vadd.f32 %v113, %v450
  %v452 = vpop.f32.mrf.mxu0
  %v453 = vadd.f32 %v113, %v452
  %454 = vmatmul.bf16.gmra.mxu0 %v325
  %v455 = vpop.f32.mrf.mxu0
  %v456 = vadd.f32 %v113, %v455
  %v457 = vpop.f32.mrf.mxu0
  %v458 = vadd.f32 %v113, %v457
  %459 = vmatmul.bf16.gmra.mxu0 %v328
  %v460 = vpop.f32.mrf.mxu0
  %v461 = vadd.f32 %v113, %v460
  %v462 = vpop.f32.mrf.mxu0
  %v463 = vadd.f32 %v113, %v462
  %464 = vmatmul.bf16.gmra.mxu0 %v331
  %v465 = vpop.f32.mrf.mxu0
  %v466 = vadd.f32 %v113, %v465
  %v467 = vpop.f32.mrf.mxu0
  %v468 = vadd.f32 %v113, %v467
  %469 = vmatmul.bf16.gmra.mxu0 %v334
  %v470 = vpop.f32.mrf.mxu0
  %v471 = vadd.f32 %v113, %v470
  %v472 = vpop.f32.mrf.mxu0
  %v473 = vadd.f32 %v113, %v472
  %474 = vmatmul.bf16.gmra.mxu0 %v337
  %v475 = vpop.f32.mrf.mxu0
  %v476 = vadd.f32 %v113, %v475
  %v477 = vpop.f32.mrf.mxu0
  %v478 = vadd.f32 %v113, %v477
  %479 = vmatmul.bf16.gmra.mxu0 %v340
  %v480 = vpop.f32.mrf.mxu0
  %v481 = vadd.f32 %v113, %v480
  %v482 = vpop.f32.mrf.mxu0
  %v483 = vadd.f32 %v113, %v482
  %484 = vmatmul.bf16.gmra.mxu0 %v343
  %v485 = vpop.f32.mrf.mxu0
  %v486 = vadd.f32 %v113, %v485
  %v487 = vpop.f32.mrf.mxu0
  %v488 = vadd.f32 %v113, %v487
  %489 = vmatmul.bf16.gmra.mxu0 %v346
  %v490 = vpop.f32.mrf.mxu0
  %v491 = vadd.f32 %v113, %v490
  %v492 = vpop.f32.mrf.mxu0
  %v493 = vadd.f32 %v113, %v492
  %494 = vmatmul.bf16.gmra.mxu0 %v349
  %v495 = vpop.f32.mrf.mxu0
  %v496 = vadd.f32 %v113, %v495
  %v497 = vpop.f32.mrf.mxu0
  %v498 = vadd.f32 %v113, %v497
  %499 = vmatmul.bf16.gmra.mxu0 %v352
  %v500 = vpop.f32.mrf.mxu0
  %v501 = vadd.f32 %v113, %v500
  %v502 = vpop.f32.mrf.mxu0
  %v503 = vadd.f32 %v113, %v502
  %504 = vmatmul.bf16.gmra.mxu0 %v355
  %v505 = vpop.f32.mrf.mxu0
  %v506 = vadd.f32 %v113, %v505
  %v507 = vpop.f32.mrf.mxu0
  %v508 = vadd.f32 %v113, %v507
  %509 = vmatmul.bf16.gmra.mxu0 %v358
  %v510 = vpop.f32.mrf.mxu0
  %v511 = vadd.f32 %v113, %v510
  %v512 = vpop.f32.mrf.mxu0
  %v513 = vadd.f32 %v113, %v512
  %514 = vmatmul.bf16.gmra.mxu0 %v361
  %v515 = vpop.f32.mrf.mxu0
  %v516 = vadd.f32 %v113, %v515
  %v517 = vpop.f32.mrf.mxu0
  %v518 = vadd.f32 %v113, %v517
  %519 = vmatmul.bf16.gmra.mxu0 %v364
  %v520 = vpop.f32.mrf.mxu0
  %v521 = vadd.f32 %v113, %v520
  %v522 = vpop.f32.mrf.mxu0
  %v523 = vadd.f32 %v113, %v522
  %524 = vmatmul.bf16.gmra.mxu0 %v367
  %v525 = vpop.f32.mrf.mxu0
  %v526 = vadd.f32 %v113, %v525
  %v527 = vpop.f32.mrf.mxu0
  %v528 = vadd.f32 %v113, %v527
  %529 = vmatmul.bf16.gmra.mxu0 %v370
  %v530 = vpop.f32.mrf.mxu0
  %v531 = vadd.f32 %v113, %v530
  %v532 = vpop.f32.mrf.mxu0
  %v533 = vadd.f32 %v113, %v532
  %534 = vmatmul.bf16.gmra.mxu0 %v373
  %v535 = vpop.f32.mrf.mxu0
  %v536 = vadd.f32 %v113, %v535
  %v537 = vpop.f32.mrf.mxu0
  %v538 = vadd.f32 %v113, %v537
  %539 = vmatmul.bf16.gmra.mxu0 %v376
  %v540 = vpop.f32.mrf.mxu0
  %v541 = vadd.f32 %v113, %v540
  %v542 = vpop.f32.mrf.mxu0
  %v543 = vadd.f32 %v113, %v542
  %544 = vmatmul.bf16.gmra.mxu0 %v379
  %v545 = vpop.f32.mrf.mxu0
  %v546 = vadd.f32 %v113, %v545
  %v547 = vpop.f32.mrf.mxu0
  %v548 = vadd.f32 %v113, %v547
  %549 = vmatmul.bf16.gmra.mxu0 %v382
  %v550 = vpop.f32.mrf.mxu0
  %v551 = vadd.f32 %v113, %v550
  %v552 = vpop.f32.mrf.mxu0
  %v553 = vadd.f32 %v113, %v552
  %554 = vmatmul.bf16.gmra.mxu0 %v385
  %v555 = vpop.f32.mrf.mxu0
  %v556 = vadd.f32 %v113, %v555
  %v557 = vpop.f32.mrf.mxu0
  %v558 = vadd.f32 %v113, %v557
  %559 = vdwg.mxu0
  %v560 = vmax.f32 %v401, 0.0
  %v561 = vmax.f32 %v403, 0.0
  %v562 = vmax.f32 %v406, 0.0
  %v563 = vmax.f32 %v408, 0.0
  %v564 = vmax.f32 %v411, 0.0
  %v565 = vmax.f32 %v413, 0.0
  %v566 = vmax.f32 %v416, 0.0
  %v567 = vmax.f32 %v418, 0.0
  %v568 = vmax.f32 %v421, 0.0
  %v569 = vmax.f32 %v423, 0.0
  %v570 = vmax.f32 %v426, 0.0
  %v571 = vmax.f32 %v428, 0.0
  %v572 = vmax.f32 %v431, 0.0
  %v573 = vmax.f32 %v433, 0.0
  %v574 = vmax.f32 %v436, 0.0
  %v575 = vmax.f32 %v438, 0.0
  %v576 = vmax.f32 %v441, 0.0
  %v577 = vmax.f32 %v443, 0.0
  %v578 = vmax.f32 %v446, 0.0
  %v579 = vmax.f32 %v448, 0.0
  %v580 = vmax.f32 %v451, 0.0
  %v581 = vmax.f32 %v453, 0.0
  %v582 = vmax.f32 %v456, 0.0
  %v583 = vmax.f32 %v458, 0.0
  %v584 = vmax.f32 %v461, 0.0
  %v585 = vmax.f32 %v463, 0.0
  %v586 = vmax.f32 %v466, 0.0
  %v587 = vmax.f32 %v468, 0.0
  %v588 = vmax.f32 %v471, 0.0
  %v589 = vmax.f32 %v473, 0.0
  %v590 = vmax.f32 %v476, 0.0
  %v591 = vmax.f32 %v478, 0.0
  %v592 = vmax.f32 %v481, 0.0
  %v593 = vmax.f32 %v483, 0.0
  %v594 = vmax.f32 %v486, 0.0
  %v595 = vmax.f32 %v488, 0.0
  %v596 = vmax.f32 %v491, 0.0
  %v597 = vmax.f32 %v493, 0.0
  %v598 = vmax.f32 %v496, 0.0
  %v599 = vmax.f32 %v498, 0.0
  %v600 = vmax.f32 %v501, 0.0
  %v601 = vmax.f32 %v503, 0.0
  %v602 = vmax.f32 %v506, 0.0
  %v603 = vmax.f32 %v508, 0.0
  %v604 = vmax.f32 %v511, 0.0
  %v605 = vmax.f32 %v513, 0.0
  %v606 = vmax.f32 %v516, 0.0
  %v607 = vmax.f32 %v518, 0.0
  %v608 = vmax.f32 %v521, 0.0
  %v609 = vmax.f32 %v523, 0.0
  %v610 = vmax.f32 %v526, 0.0
  %v611 = vmax.f32 %v528, 0.0
  %v612 = vmax.f32 %v531, 0.0
  %v613 = vmax.f32 %v533, 0.0
  %v614 = vmax.f32 %v536, 0.0
  %v615 = vmax.f32 %v538, 0.0
  %v616 = vmax.f32 %v541, 0.0
  %v617 = vmax.f32 %v543, 0.0
  %v618 = vmax.f32 %v546, 0.0
  %v619 = vmax.f32 %v548, 0.0
  %v620 = vmax.f32 %v551, 0.0
  %v621 = vmax.f32 %v553, 0.0
  %v622 = vmax.f32 %v556, 0.0
  %v623 = vmax.f32 %v558, 0.0
  %v624 = vpack.c.bf16 %v561, %v560
  %v625 = vpack.c.bf16 %v563, %v562
  %v626 = vpack.c.bf16 %v565, %v564
  %v627 = vpack.c.bf16 %v567, %v566
  %v628 = vpack.c.bf16 %v569, %v568
  %v629 = vpack.c.bf16 %v571, %v570
  %v630 = vpack.c.bf16 %v573, %v572
  %v631 = vpack.c.bf16 %v575, %v574
  %v632 = vpack.c.bf16 %v577, %v576
  %v633 = vpack.c.bf16 %v579, %v578
  %v634 = vpack.c.bf16 %v581, %v580
  %v635 = vpack.c.bf16 %v583, %v582
  %v636 = vpack.c.bf16 %v585, %v584
  %v637 = vpack.c.bf16 %v587, %v586
  %v638 = vpack.c.bf16 %v589, %v588
  %v639 = vpack.c.bf16 %v591, %v590
  %v640 = vpack.c.bf16 %v593, %v592
  %v641 = vpack.c.bf16 %v595, %v594
  %v642 = vpack.c.bf16 %v597, %v596
  %v643 = vpack.c.bf16 %v599, %v598
  %v644 = vpack.c.bf16 %v601, %v600
  %v645 = vpack.c.bf16 %v603, %v602
  %v646 = vpack.c.bf16 %v605, %v604
  %v647 = vpack.c.bf16 %v607, %v606
  %v648 = vpack.c.bf16 %v609, %v608
  %v649 = vpack.c.bf16 %v611, %v610
  %v650 = vpack.c.bf16 %v613, %v612
  %v651 = vpack.c.bf16 %v615, %v614
  %v652 = vpack.c.bf16 %v617, %v616
  %v653 = vpack.c.bf16 %v619, %v618
  %v654 = vpack.c.bf16 %v621, %v620
  %v655 = vpack.c.bf16 %v623, %v622
  %v656 = vld [vmem:[%s3] sm:$0xf]
  %v657 = vld [vmem:[%s3 + $0x4] sm:$0xf]
  %v658 = vld [vmem:[%s3 + $0x8] sm:$0xf]
  %v659 = vld [vmem:[%s3 + $0xc] sm:$0xf]
  %v660 = vld [vmem:[%s4] sm:$0x1]
  %v662 = vperm.slane %v660, 0
  %v668 = vunpack.c.l.b16 %v656
  %v669 = vunpack.c.l.b16 %v657
  %v670 = vunpack.c.l.b16 %v658
  %v671 = vunpack.c.l.b16 %v659
  %v672 = vpack.c.b16 %v669, %v668
  %v673 = vpack.c.b16 %v671, %v670
  %vm676 = vcmask 261120
  %v678 = vsel %vm676, %v624, 0
  %v681 = vsel %vm676, %v625, 0
  %v684 = vsel %vm676, %v626, 0
  %v687 = vsel %vm676, %v627, 0
  %v690 = vsel %vm676, %v628, 0
  %v693 = vsel %vm676, %v629, 0
  %v696 = vsel %vm676, %v630, 0
  %v699 = vsel %vm676, %v631, 0
  %v702 = vsel %vm676, %v632, 0
  %v705 = vsel %vm676, %v633, 0
  %v708 = vsel %vm676, %v634, 0
  %v711 = vsel %vm676, %v635, 0
  %v714 = vsel %vm676, %v636, 0
  %v717 = vsel %vm676, %v637, 0
  %v720 = vsel %vm676, %v638, 0
  %v723 = vsel %vm676, %v639, 0
  %v726 = vsel %vm676, %v640, 0
  %v729 = vsel %vm676, %v641, 0
  %v732 = vsel %vm676, %v642, 0
  %v735 = vsel %vm676, %v643, 0
  %v738 = vsel %vm676, %v644, 0
  %v741 = vsel %vm676, %v645, 0
  %v744 = vsel %vm676, %v646, 0
  %v747 = vsel %vm676, %v647, 0
  %v750 = vsel %vm676, %v648, 0
  %v753 = vsel %vm676, %v649, 0
  %v756 = vsel %vm676, %v650, 0
  %v759 = vsel %vm676, %v651, 0
  %v762 = vsel %vm676, %v652, 0
  %v765 = vsel %vm676, %v653, 0
  %v768 = vsel %vm676, %v654, 0
  %v771 = vsel %vm676, %v655, 0
  %773 = vmatpush.bf16.msra.mxu0 0
  %774 = vmatpush.bf16.msra.mxu0 0
  %775 = vmatpush.bf16.msra.mxu0 0
  %776 = vmatpush.bf16.msra.mxu0 0
  %777 = vmatpush.bf16.msra.mxu0 0
  %778 = vmatpush.bf16.msra.mxu0 0
  %779 = vmatpush.bf16.msra.mxu0 %v673
  %780 = vmatpush.bf16.msra.mxu0 %v672
  %781 = vmatmul.bf16.gmra.mxu0 %v678
  %v782 = vpop.f32.mrf.mxu0
  %v783 = vadd.f32 %v662, %v782
  %v784 = vpop.f32.mrf.mxu0
  %v785 = vadd.f32 %v662, %v784
  %786 = vmatmul.bf16.gmra.mxu0 %v681
  %v787 = vpop.f32.mrf.mxu0
  %v788 = vadd.f32 %v662, %v787
  %v789 = vpop.f32.mrf.mxu0
  %v790 = vadd.f32 %v662, %v789
  %791 = vmatmul.bf16.gmra.mxu0 %v684
  %v792 = vpop.f32.mrf.mxu0
  %v793 = vadd.f32 %v662, %v792
  %v794 = vpop.f32.mrf.mxu0
  %v795 = vadd.f32 %v662, %v794
  %796 = vmatmul.bf16.gmra.mxu0 %v687
  %v797 = vpop.f32.mrf.mxu0
  %v798 = vadd.f32 %v662, %v797
  %v799 = vpop.f32.mrf.mxu0
  %v800 = vadd.f32 %v662, %v799
  %801 = vmatmul.bf16.gmra.mxu0 %v690
  %v802 = vpop.f32.mrf.mxu0
  %v803 = vadd.f32 %v662, %v802
  %v804 = vpop.f32.mrf.mxu0
  %v805 = vadd.f32 %v662, %v804
  %806 = vmatmul.bf16.gmra.mxu0 %v693
  %v807 = vpop.f32.mrf.mxu0
  %v808 = vadd.f32 %v662, %v807
  %v809 = vpop.f32.mrf.mxu0
  %v810 = vadd.f32 %v662, %v809
  %811 = vmatmul.bf16.gmra.mxu0 %v696
  %v812 = vpop.f32.mrf.mxu0
  %v813 = vadd.f32 %v662, %v812
  %v814 = vpop.f32.mrf.mxu0
  %v815 = vadd.f32 %v662, %v814
  %816 = vmatmul.bf16.gmra.mxu0 %v699
  %v817 = vpop.f32.mrf.mxu0
  %v818 = vadd.f32 %v662, %v817
  %v819 = vpop.f32.mrf.mxu0
  %v820 = vadd.f32 %v662, %v819
  %821 = vmatmul.bf16.gmra.mxu0 %v702
  %v822 = vpop.f32.mrf.mxu0
  %v823 = vadd.f32 %v662, %v822
  %v824 = vpop.f32.mrf.mxu0
  %v825 = vadd.f32 %v662, %v824
  %826 = vmatmul.bf16.gmra.mxu0 %v705
  %v827 = vpop.f32.mrf.mxu0
  %v828 = vadd.f32 %v662, %v827
  %v829 = vpop.f32.mrf.mxu0
  %v830 = vadd.f32 %v662, %v829
  %831 = vmatmul.bf16.gmra.mxu0 %v708
  %v832 = vpop.f32.mrf.mxu0
  %v833 = vadd.f32 %v662, %v832
  %v834 = vpop.f32.mrf.mxu0
  %v835 = vadd.f32 %v662, %v834
  %836 = vmatmul.bf16.gmra.mxu0 %v711
  %v837 = vpop.f32.mrf.mxu0
  %v838 = vadd.f32 %v662, %v837
  %v839 = vpop.f32.mrf.mxu0
  %v840 = vadd.f32 %v662, %v839
  %841 = vmatmul.bf16.gmra.mxu0 %v714
  %v842 = vpop.f32.mrf.mxu0
  %v843 = vadd.f32 %v662, %v842
  %v844 = vpop.f32.mrf.mxu0
  %v845 = vadd.f32 %v662, %v844
  %846 = vmatmul.bf16.gmra.mxu0 %v717
  %v847 = vpop.f32.mrf.mxu0
  %v848 = vadd.f32 %v662, %v847
  %v849 = vpop.f32.mrf.mxu0
  %v850 = vadd.f32 %v662, %v849
  %851 = vmatmul.bf16.gmra.mxu0 %v720
  %v852 = vpop.f32.mrf.mxu0
  %v853 = vadd.f32 %v662, %v852
  %v854 = vpop.f32.mrf.mxu0
  %v855 = vadd.f32 %v662, %v854
  %856 = vmatmul.bf16.gmra.mxu0 %v723
  %v857 = vpop.f32.mrf.mxu0
  %v858 = vadd.f32 %v662, %v857
  %v859 = vpop.f32.mrf.mxu0
  %v860 = vadd.f32 %v662, %v859
  %861 = vmatmul.bf16.gmra.mxu0 %v726
  %v862 = vpop.f32.mrf.mxu0
  %v863 = vadd.f32 %v662, %v862
  %v864 = vpop.f32.mrf.mxu0
  %v865 = vadd.f32 %v662, %v864
  %866 = vmatmul.bf16.gmra.mxu0 %v729
  %v867 = vpop.f32.mrf.mxu0
  %v868 = vadd.f32 %v662, %v867
  %v869 = vpop.f32.mrf.mxu0
  %v870 = vadd.f32 %v662, %v869
  %871 = vmatmul.bf16.gmra.mxu0 %v732
  %v872 = vpop.f32.mrf.mxu0
  %v873 = vadd.f32 %v662, %v872
  %v874 = vpop.f32.mrf.mxu0
  %v875 = vadd.f32 %v662, %v874
  %876 = vmatmul.bf16.gmra.mxu0 %v735
  %v877 = vpop.f32.mrf.mxu0
  %v878 = vadd.f32 %v662, %v877
  %v879 = vpop.f32.mrf.mxu0
  %v880 = vadd.f32 %v662, %v879
  %881 = vmatmul.bf16.gmra.mxu0 %v738
  %v882 = vpop.f32.mrf.mxu0
  %v883 = vadd.f32 %v662, %v882
  %v884 = vpop.f32.mrf.mxu0
  %v885 = vadd.f32 %v662, %v884
  %886 = vmatmul.bf16.gmra.mxu0 %v741
  %v887 = vpop.f32.mrf.mxu0
  %v888 = vadd.f32 %v662, %v887
  %v889 = vpop.f32.mrf.mxu0
  %v890 = vadd.f32 %v662, %v889
  %891 = vmatmul.bf16.gmra.mxu0 %v744
  %v892 = vpop.f32.mrf.mxu0
  %v893 = vadd.f32 %v662, %v892
  %v894 = vpop.f32.mrf.mxu0
  %v895 = vadd.f32 %v662, %v894
  %896 = vmatmul.bf16.gmra.mxu0 %v747
  %v897 = vpop.f32.mrf.mxu0
  %v898 = vadd.f32 %v662, %v897
  %v899 = vpop.f32.mrf.mxu0
  %v900 = vadd.f32 %v662, %v899
  %901 = vmatmul.bf16.gmra.mxu0 %v750
  %v902 = vpop.f32.mrf.mxu0
  %v903 = vadd.f32 %v662, %v902
  %v904 = vpop.f32.mrf.mxu0
  %v905 = vadd.f32 %v662, %v904
  %906 = vmatmul.bf16.gmra.mxu0 %v753
  %v907 = vpop.f32.mrf.mxu0
  %v908 = vadd.f32 %v662, %v907
  %v909 = vpop.f32.mrf.mxu0
  %v910 = vadd.f32 %v662, %v909
  %911 = vmatmul.bf16.gmra.mxu0 %v756
  %v912 = vpop.f32.mrf.mxu0
  %v913 = vadd.f32 %v662, %v912
  %v914 = vpop.f32.mrf.mxu0
  %v915 = vadd.f32 %v662, %v914
  %916 = vmatmul.bf16.gmra.mxu0 %v759
  %v917 = vpop.f32.mrf.mxu0
  %v918 = vadd.f32 %v662, %v917
  %v919 = vpop.f32.mrf.mxu0
  %v920 = vadd.f32 %v662, %v919
  %921 = vmatmul.bf16.gmra.mxu0 %v762
  %v922 = vpop.f32.mrf.mxu0
  %v923 = vadd.f32 %v662, %v922
  %v924 = vpop.f32.mrf.mxu0
  %v925 = vadd.f32 %v662, %v924
  %926 = vmatmul.bf16.gmra.mxu0 %v765
  %v927 = vpop.f32.mrf.mxu0
  %v928 = vadd.f32 %v662, %v927
  %v929 = vpop.f32.mrf.mxu0
  %v930 = vadd.f32 %v662, %v929
  %931 = vmatmul.bf16.gmra.mxu0 %v768
  %v932 = vpop.f32.mrf.mxu0
  %v933 = vadd.f32 %v662, %v932
  %v934 = vpop.f32.mrf.mxu0
  %v935 = vadd.f32 %v662, %v934
  %936 = vmatmul.bf16.gmra.mxu0 %v771
  %v937 = vpop.f32.mrf.mxu0
  %v938 = vadd.f32 %v662, %v937
  %v939 = vpop.f32.mrf.mxu0
  %v940 = vadd.f32 %v662, %v939
  %941 = vdwg.mxu0
  %v942 = vmax.f32 %v783, 0.0
  %v943 = vmax.f32 %v785, 0.0
  %v944 = vmax.f32 %v788, 0.0
  %v945 = vmax.f32 %v790, 0.0
  %v946 = vmax.f32 %v793, 0.0
  %v947 = vmax.f32 %v795, 0.0
  %v948 = vmax.f32 %v798, 0.0
  %v949 = vmax.f32 %v800, 0.0
  %v950 = vmax.f32 %v803, 0.0
  %v951 = vmax.f32 %v805, 0.0
  %v952 = vmax.f32 %v808, 0.0
  %v953 = vmax.f32 %v810, 0.0
  %v954 = vmax.f32 %v813, 0.0
  %v955 = vmax.f32 %v815, 0.0
  %v956 = vmax.f32 %v818, 0.0
  %v957 = vmax.f32 %v820, 0.0
  %v958 = vmax.f32 %v823, 0.0
  %v959 = vmax.f32 %v825, 0.0
  %v960 = vmax.f32 %v828, 0.0
  %v961 = vmax.f32 %v830, 0.0
  %v962 = vmax.f32 %v833, 0.0
  %v963 = vmax.f32 %v835, 0.0
  %v964 = vmax.f32 %v838, 0.0
  %v965 = vmax.f32 %v840, 0.0
  %v966 = vmax.f32 %v843, 0.0
  %v967 = vmax.f32 %v845, 0.0
  %v968 = vmax.f32 %v848, 0.0
  %v969 = vmax.f32 %v850, 0.0
  %v970 = vmax.f32 %v853, 0.0
  %v971 = vmax.f32 %v855, 0.0
  %v972 = vmax.f32 %v858, 0.0
  %v973 = vmax.f32 %v860, 0.0
  %v974 = vmax.f32 %v863, 0.0
  %v975 = vmax.f32 %v865, 0.0
  %v976 = vmax.f32 %v868, 0.0
  %v977 = vmax.f32 %v870, 0.0
  %v978 = vmax.f32 %v873, 0.0
  %v979 = vmax.f32 %v875, 0.0
  %v980 = vmax.f32 %v878, 0.0
  %v981 = vmax.f32 %v880, 0.0
  %v982 = vmax.f32 %v883, 0.0
  %v983 = vmax.f32 %v885, 0.0
  %v984 = vmax.f32 %v888, 0.0
  %v985 = vmax.f32 %v890, 0.0
  %v986 = vmax.f32 %v893, 0.0
  %v987 = vmax.f32 %v895, 0.0
  %v988 = vmax.f32 %v898, 0.0
  %v989 = vmax.f32 %v900, 0.0
  %v990 = vmax.f32 %v903, 0.0
  %v991 = vmax.f32 %v905, 0.0
  %v992 = vmax.f32 %v908, 0.0
  %v993 = vmax.f32 %v910, 0.0
  %v994 = vmax.f32 %v913, 0.0
  %v995 = vmax.f32 %v915, 0.0
  %v996 = vmax.f32 %v918, 0.0
  %v997 = vmax.f32 %v920, 0.0
  %v998 = vmax.f32 %v923, 0.0
  %v999 = vmax.f32 %v925, 0.0
  %v1000 = vmax.f32 %v928, 0.0
  %v1001 = vmax.f32 %v930, 0.0
  %v1002 = vmax.f32 %v933, 0.0
  %v1003 = vmax.f32 %v935, 0.0
  %v1004 = vmax.f32 %v938, 0.0
  %v1005 = vmax.f32 %v940, 0.0
  %v1006 = vld [vmem:[%s5] sm:$0xf]
  %v1007 = vpack.c.bf16 %v943, %v942
  %v1008 = vpack.c.bf16 %v945, %v944
  %v1009 = vpack.c.bf16 %v947, %v946
  %v1010 = vpack.c.bf16 %v949, %v948
  %v1011 = vpack.c.bf16 %v951, %v950
  %v1012 = vpack.c.bf16 %v953, %v952
  %v1013 = vpack.c.bf16 %v955, %v954
  %v1014 = vpack.c.bf16 %v957, %v956
  %v1015 = vpack.c.bf16 %v959, %v958
  %v1016 = vpack.c.bf16 %v961, %v960
  %v1017 = vpack.c.bf16 %v963, %v962
  %v1018 = vpack.c.bf16 %v965, %v964
  %v1019 = vpack.c.bf16 %v967, %v966
  %v1020 = vpack.c.bf16 %v969, %v968
  %v1021 = vpack.c.bf16 %v971, %v970
  %v1022 = vpack.c.bf16 %v973, %v972
  %v1023 = vpack.c.bf16 %v975, %v974
  %v1024 = vpack.c.bf16 %v977, %v976
  %v1025 = vpack.c.bf16 %v979, %v978
  %v1026 = vpack.c.bf16 %v981, %v980
  %v1027 = vpack.c.bf16 %v983, %v982
  %v1028 = vpack.c.bf16 %v985, %v984
  %v1029 = vpack.c.bf16 %v987, %v986
  %v1030 = vpack.c.bf16 %v989, %v988
  %v1031 = vpack.c.bf16 %v991, %v990
  %v1032 = vpack.c.bf16 %v993, %v992
  %v1033 = vpack.c.bf16 %v995, %v994
  %v1034 = vpack.c.bf16 %v997, %v996
  %v1035 = vpack.c.bf16 %v999, %v998
  %v1036 = vpack.c.bf16 %v1001, %v1000
  %v1037 = vpack.c.bf16 %v1003, %v1002
  %v1038 = vpack.c.bf16 %v1005, %v1004
  %1040 = vst [vmem:[#allocation1] ss:$9 sm:$0xff] %v1006
  %v1041 = vld [vmem:[#allocation1] sm:$0xff]
  %v1042 = vld [vmem:[#allocation1 + $0x9] sm:$0xff]
  %v1043 = vld [vmem:[#allocation1 + $0x12] sm:$0xff]
  %v1044 = vld [vmem:[#allocation1 + $0x1b] sm:$0xff]
  %1049 = vmatpush.bf16.msra.mxu0 %v1014
  %1050 = vmatpush.bf16.msra.mxu0 %v1013
  %1051 = vmatpush.bf16.msra.mxu0 %v1012
  %1052 = vmatpush.bf16.msra.mxu0 %v1011
  %1053 = vmatpush.bf16.msra.mxu0 %v1010
  %1054 = vmatpush.bf16.msra.mxu0 %v1009
  %1055 = vmatpush.bf16.msra.mxu0 %v1008
  %1056 = vmatpush.bf16.msra.mxu0 %v1007
  %1057 = vmatmul.bf16.gmra.mxu0 %v1041
  %v1058 = vpop.f32.mrf.mxu0
  %v1059 = vadd.f32 0.0, %v1058
  %v1060 = vpop.f32.mrf.mxu0
  %1061 = vdwg.mxu0
  %1062 = vmatpush.bf16.msra.mxu0 %v1022
  %1063 = vmatpush.bf16.msra.mxu0 %v1021
  %1064 = vmatpush.bf16.msra.mxu0 %v1020
  %1065 = vmatpush.bf16.msra.mxu0 %v1019
  %1066 = vmatpush.bf16.msra.mxu0 %v1018
  %1067 = vmatpush.bf16.msra.mxu0 %v1017
  %1068 = vmatpush.bf16.msra.mxu0 %v1016
  %1069 = vmatpush.bf16.msra.mxu0 %v1015
  %1070 = vmatmul.bf16.gmra.mxu0 %v1042
  %v1071 = vpop.f32.mrf.mxu0
  %v1072 = vadd.f32 %v1059, %v1071
  %v1073 = vpop.f32.mrf.mxu0
  %1074 = vdwg.mxu0
  %1075 = vmatpush.bf16.msra.mxu0 %v1030
  %1076 = vmatpush.bf16.msra.mxu0 %v1029
  %1077 = vmatpush.bf16.msra.mxu0 %v1028
  %1078 = vmatpush.bf16.msra.mxu0 %v1027
  %1079 = vmatpush.bf16.msra.mxu0 %v1026
  %1080 = vmatpush.bf16.msra.mxu0 %v1025
  %1081 = vmatpush.bf16.msra.mxu0 %v1024
  %1082 = vmatpush.bf16.msra.mxu0 %v1023
  %1083 = vmatmul.bf16.gmra.mxu0 %v1043
  %v1084 = vpop.f32.mrf.mxu0
  %v1085 = vadd.f32 %v1072, %v1084
  %v1086 = vpop.f32.mrf.mxu0
  %1087 = vdwg.mxu0
  %1088 = vmatpush.bf16.msra.mxu0 %v1038
  %1089 = vmatpush.bf16.msra.mxu0 %v1037
  %1090 = vmatpush.bf16.msra.mxu0 %v1036
  %1091 = vmatpush.bf16.msra.mxu0 %v1035
  %1092 = vmatpush.bf16.msra.mxu0 %v1034
  %1093 = vmatpush.bf16.msra.mxu0 %v1033
  %1094 = vmatpush.bf16.msra.mxu0 %v1032
  %1095 = vmatpush.bf16.msra.mxu0 %v1031
  %1096 = vmatmul.bf16.gmra.mxu0 %v1044
  %v1097 = vpop.f32.mrf.mxu0
  %v1098 = vadd.f32 %v1085, %v1097
  %v1099 = vpop.f32.mrf.mxu0
  %1100 = vdwg.mxu0
  %v1101 = vpack.c.bf16 %v1098, %v1098
  %v1102 = vld [vmem:[%s6] sm:$0x1]
  %v1103 = vld [vmem:[%s7] sm:$0xf]
  %v1104 = vld [vmem:[%s7 + $0x4] sm:$0xf]
  %v1105 = vld [vmem:[%s7 + $0x8] sm:$0xf]
  %v1106 = vld [vmem:[%s7 + $0xc] sm:$0xf]
  %v1107 = vld [vmem:[%s7 + $0x10] sm:$0xf]
  %v1108 = vld [vmem:[%s7 + $0x14] sm:$0xf]
  %v1109 = vld [vmem:[%s7 + $0x18] sm:$0xf]
  %v1110 = vld [vmem:[%s7 + $0x1c] sm:$0xf]
  %v1111 = vld [vmem:[%s7 + $0x20] sm:$0xf]
  %v1112 = vld [vmem:[%s7 + $0x24] sm:$0xf]
  %v1113 = vld [vmem:[%s7 + $0x28] sm:$0xf]
  %v1114 = vld [vmem:[%s7 + $0x2c] sm:$0xf]
  %v1115 = vld [vmem:[%s7 + $0x30] sm:$0xf]
  %v1116 = vld [vmem:[%s7 + $0x34] sm:$0xf]
  %v1117 = vld [vmem:[%s7 + $0x38] sm:$0xf]
  %v1118 = vld [vmem:[%s7 + $0x3c] sm:$0xf]
  %v1119 = vld [vmem:[%s8] sm:$0xf]
  %vm1120 = vcmask 64512
  %v1122 = vsel %vm1120, %v1102, 0
  %vm1124 = vcmask 1043456
  %v1126 = vsel %vm1124, %v1119, 0
  %1128 = vmatpush.bf16.msra.mxu0 0
  %1129 = vmatpush.bf16.msra.mxu0 0
  %1130 = vmatpush.bf16.msra.mxu0 0
  %1131 = vmatpush.bf16.msra.mxu0 0
  %1132 = vmatpush.bf16.msra.mxu0 0
  %1133 = vmatpush.bf16.msra.mxu0 0
  %1134 = vmatpush.bf16.msra.mxu0 0
  %1135 = vmatpush.bf16.msra.mxu0 %v1126
  %1136 = vmatmul.bf16.gmra.mxu0 %v1122
  %v1137 = vpop.f32.mrf.mxu0
  %v1138 = vadd.f32 0.0, %v1137
  %v1139 = vpop.f32.mrf.mxu0
  %1140 = vdwg.mxu0
  %v1157 = vunpack.c.l.b16 %v1103
  %v1158 = vunpack.c.l.b16 %v1104
  %v1159 = vunpack.c.l.b16 %v1105
  %v1160 = vunpack.c.l.b16 %v1106
  %v1161 = vunpack.c.l.b16 %v1107
  %v1162 = vunpack.c.l.b16 %v1108
  %v1163 = vunpack.c.l.b16 %v1109
  %v1164 = vunpack.c.l.b16 %v1110
  %v1165 = vunpack.c.l.b16 %v1111
  %v1166 = vunpack.c.l.b16 %v1112
  %v1167 = vunpack.c.l.b16 %v1113
  %v1168 = vunpack.c.l.b16 %v1114
  %v1169 = vunpack.c.l.b16 %v1115
  %v1170 = vunpack.c.l.b16 %v1116
  %v1171 = vunpack.c.l.b16 %v1117
  %v1172 = vunpack.c.l.b16 %v1118
  %v1173 = vpack.c.b16 %v1158, %v1157
  %v1174 = vpack.c.b16 %v1160, %v1159
  %v1175 = vpack.c.b16 %v1162, %v1161
  %v1176 = vpack.c.b16 %v1164, %v1163
  %v1177 = vpack.c.b16 %v1166, %v1165
  %v1178 = vpack.c.b16 %v1168, %v1167
  %v1179 = vpack.c.b16 %v1170, %v1169
  %v1180 = vpack.c.b16 %v1172, %v1171
  %1189 = vmatpush.bf16.msra.mxu0 %v1180
  %1190 = vmatpush.bf16.msra.mxu0 %v1179
  %1191 = vmatpush.bf16.msra.mxu0 %v1178
  %1192 = vmatpush.bf16.msra.mxu0 %v1177
  %1193 = vmatpush.bf16.msra.mxu0 %v1176
  %1194 = vmatpush.bf16.msra.mxu0 %v1175
  %1195 = vmatpush.bf16.msra.mxu0 %v1174
  %1196 = vmatpush.bf16.msra.mxu0 %v1173
  %1197 = vmatmul.bf16.gmra.mxu0 %v1101
  %v1198 = vpop.f32.mrf.mxu0
  %v1199 = vadd.f32 %v1138, %v1198
  %v1200 = vpop.f32.mrf.mxu0
  %1201 = vdwg.mxu0
  %v1202 = vld [vmem:[%s9] sm:$0x1]
  %v1204 = vperm.slane %v1202, 0
  %v1206 = vadd.f32 %v1199, %v1204
  %v1207 = vmax.f32 %v1206, 0.0
  %s1208 = scalar_lea.vmem %s7, 64
  %v1209 = vld [vmem:[%s1208] sm:$0xf]
  %v1210 = vld [vmem:[%s1208 + $0x4] sm:$0xf]
  %v1211 = vld [vmem:[%s1208 + $0x8] sm:$0xf]
  %v1212 = vld [vmem:[%s1208 + $0xc] sm:$0xf]
  %v1213 = vld [vmem:[%s1208 + $0x10] sm:$0xf]
  %v1214 = vld [vmem:[%s1208 + $0x14] sm:$0xf]
  %v1215 = vld [vmem:[%s1208 + $0x18] sm:$0xf]
  %v1216 = vld [vmem:[%s1208 + $0x1c] sm:$0xf]
  %v1217 = vld [vmem:[%s1208 + $0x20] sm:$0xf]
  %v1218 = vld [vmem:[%s1208 + $0x24] sm:$0xf]
  %v1219 = vld [vmem:[%s1208 + $0x28] sm:$0xf]
  %v1220 = vld [vmem:[%s1208 + $0x2c] sm:$0xf]
  %v1221 = vld [vmem:[%s1208 + $0x30] sm:$0xf]
  %v1222 = vld [vmem:[%s1208 + $0x34] sm:$0xf]
  %v1223 = vld [vmem:[%s1208 + $0x38] sm:$0xf]
  %v1224 = vld [vmem:[%s1208 + $0x3c] sm:$0xf]
  %s1225 = scalar_lea.vmem %s8, 4
  %v1226 = vld [vmem:[%s1225] sm:$0xf]
  %v1228 = vsel %vm1124, %v1226, 0
  %1230 = vmatpush.bf16.msra.mxu0 0
  %1231 = vmatpush.bf16.msra.mxu0 0
  %1232 = vmatpush.bf16.msra.mxu0 0
  %1233 = vmatpush.bf16.msra.mxu0 0
  %1234 = vmatpush.bf16.msra.mxu0 0
  %1235 = vmatpush.bf16.msra.mxu0 0
  %1236 = vmatpush.bf16.msra.mxu0 0
  %1237 = vmatpush.bf16.msra.mxu0 %v1228
  %1238 = vmatmul.bf16.gmra.mxu0 %v1122
  %v1239 = vpop.f32.mrf.mxu0
  %v1240 = vadd.f32 0.0, %v1239
  %v1241 = vpop.f32.mrf.mxu0
  %1242 = vdwg.mxu0
  %v1259 = vunpack.c.l.b16 %v1209
  %v1260 = vunpack.c.l.b16 %v1210
  %v1261 = vunpack.c.l.b16 %v1211
  %v1262 = vunpack.c.l.b16 %v1212
  %v1263 = vunpack.c.l.b16 %v1213
  %v1264 = vunpack.c.l.b16 %v1214
  %v1265 = vunpack.c.l.b16 %v1215
  %v1266 = vunpack.c.l.b16 %v1216
  %v1267 = vunpack.c.l.b16 %v1217
  %v1268 = vunpack.c.l.b16 %v1218
  %v1269 = vunpack.c.l.b16 %v1219
  %v1270 = vunpack.c.l.b16 %v1220
  %v1271 = vunpack.c.l.b16 %v1221
  %v1272 = vunpack.c.l.b16 %v1222
  %v1273 = vunpack.c.l.b16 %v1223
  %v1274 = vunpack.c.l.b16 %v1224
  %v1275 = vpack.c.b16 %v1260, %v1259
  %v1276 = vpack.c.b16 %v1262, %v1261
  %v1277 = vpack.c.b16 %v1264, %v1263
  %v1278 = vpack.c.b16 %v1266, %v1265
  %v1279 = vpack.c.b16 %v1268, %v1267
  %v1280 = vpack.c.b16 %v1270, %v1269
  %v1281 = vpack.c.b16 %v1272, %v1271
  %v1282 = vpack.c.b16 %v1274, %v1273
  %1291 = vmatpush.bf16.msra.mxu0 %v1282
  %1292 = vmatpush.bf16.msra.mxu0 %v1281
  %1293 = vmatpush.bf16.msra.mxu0 %v1280
  %1294 = vmatpush.bf16.msra.mxu0 %v1279
  %1295 = vmatpush.bf16.msra.mxu0 %v1278
  %1296 = vmatpush.bf16.msra.mxu0 %v1277
  %1297 = vmatpush.bf16.msra.mxu0 %v1276
  %1298 = vmatpush.bf16.msra.mxu0 %v1275
  %1299 = vmatmul.bf16.gmra.mxu0 %v1101
  %v1300 = vpop.f32.mrf.mxu0
  %v1301 = vadd.f32 %v1240, %v1300
  %v1302 = vpop.f32.mrf.mxu0
  %1303 = vdwg.mxu0
  %s1304 = scalar_lea.vmem %s9, 1
  %v1305 = vld [vmem:[%s1304] sm:$0x1]
  %v1307 = vperm.slane %v1305, 0
  %v1309 = vadd.f32 %v1301, %v1307
  %v1310 = vmax.f32 %v1309, 0.0
  %v1311 = vmax.f32 %v1207, %v1310
  %s1312 = scalar_lea.vmem %s7, 128
  %v1313 = vld [vmem:[%s1312] sm:$0xf]
  %v1314 = vld [vmem:[%s1312 + $0x4] sm:$0xf]
  %v1315 = vld [vmem:[%s1312 + $0x8] sm:$0xf]
  %v1316 = vld [vmem:[%s1312 + $0xc] sm:$0xf]
  %v1317 = vld [vmem:[%s1312 + $0x10] sm:$0xf]
  %v1318 = vld [vmem:[%s1312 + $0x14] sm:$0xf]
  %v1319 = vld [vmem:[%s1312 + $0x18] sm:$0xf]
  %v1320 = vld [vmem:[%s1312 + $0x1c] sm:$0xf]
  %v1321 = vld [vmem:[%s1312 + $0x20] sm:$0xf]
  %v1322 = vld [vmem:[%s1312 + $0x24] sm:$0xf]
  %v1323 = vld [vmem:[%s1312 + $0x28] sm:$0xf]
  %v1324 = vld [vmem:[%s1312 + $0x2c] sm:$0xf]
  %v1325 = vld [vmem:[%s1312 + $0x30] sm:$0xf]
  %v1326 = vld [vmem:[%s1312 + $0x34] sm:$0xf]
  %v1327 = vld [vmem:[%s1312 + $0x38] sm:$0xf]
  %v1328 = vld [vmem:[%s1312 + $0x3c] sm:$0xf]
  %s1329 = scalar_lea.vmem %s8, 8
  %v1330 = vld [vmem:[%s1329] sm:$0xf]
  %v1332 = vsel %vm1124, %v1330, 0
  %1334 = vmatpush.bf16.msra.mxu0 0
  %1335 = vmatpush.bf16.msra.mxu0 0
  %1336 = vmatpush.bf16.msra.mxu0 0
  %1337 = vmatpush.bf16.msra.mxu0 0
  %1338 = vmatpush.bf16.msra.mxu0 0
  %1339 = vmatpush.bf16.msra.mxu0 0
  %1340 = vmatpush.bf16.msra.mxu0 0
  %1341 = vmatpush.bf16.msra.mxu0 %v1332
  %1342 = vmatmul.bf16.gmra.mxu0 %v1122
  %v1343 = vpop.f32.mrf.mxu0
  %v1344 = vadd.f32 0.0, %v1343
  %v1345 = vpop.f32.mrf.mxu0
  %1346 = vdwg.mxu0
  %v1363 = vunpack.c.l.b16 %v1313
  %v1364 = vunpack.c.l.b16 %v1314
  %v1365 = vunpack.c.l.b16 %v1315
  %v1366 = vunpack.c.l.b16 %v1316
  %v1367 = vunpack.c.l.b16 %v1317
  %v1368 = vunpack.c.l.b16 %v1318
  %v1369 = vunpack.c.l.b16 %v1319
  %v1370 = vunpack.c.l.b16 %v1320
  %v1371 = vunpack.c.l.b16 %v1321
  %v1372 = vunpack.c.l.b16 %v1322
  %v1373 = vunpack.c.l.b16 %v1323
  %v1374 = vunpack.c.l.b16 %v1324
  %v1375 = vunpack.c.l.b16 %v1325
  %v1376 = vunpack.c.l.b16 %v1326
  %v1377 = vunpack.c.l.b16 %v1327
  %v1378 = vunpack.c.l.b16 %v1328
  %v1379 = vpack.c.b16 %v1364, %v1363
  %v1380 = vpack.c.b16 %v1366, %v1365
  %v1381 = vpack.c.b16 %v1368, %v1367
  %v1382 = vpack.c.b16 %v1370, %v1369
  %v1383 = vpack.c.b16 %v1372, %v1371
  %v1384 = vpack.c.b16 %v1374, %v1373
  %v1385 = vpack.c.b16 %v1376, %v1375
  %v1386 = vpack.c.b16 %v1378, %v1377
  %1395 = vmatpush.bf16.msra.mxu0 %v1386
  %1396 = vmatpush.bf16.msra.mxu0 %v1385
  %1397 = vmatpush.bf16.msra.mxu0 %v1384
  %1398 = vmatpush.bf16.msra.mxu0 %v1383
  %1399 = vmatpush.bf16.msra.mxu0 %v1382
  %1400 = vmatpush.bf16.msra.mxu0 %v1381
  %1401 = vmatpush.bf16.msra.mxu0 %v1380
  %1402 = vmatpush.bf16.msra.mxu0 %v1379
  %1403 = vmatmul.bf16.gmra.mxu0 %v1101
  %v1404 = vpop.f32.mrf.mxu0
  %v1405 = vadd.f32 %v1344, %v1404
  %v1406 = vpop.f32.mrf.mxu0
  %1407 = vdwg.mxu0
  %s1408 = scalar_lea.vmem %s9, 2
  %v1409 = vld [vmem:[%s1408] sm:$0x1]
  %v1411 = vperm.slane %v1409, 0
  %v1413 = vadd.f32 %v1405, %v1411
  %v1414 = vmax.f32 %v1413, 0.0
  %v1415 = vmax.f32 %v1311, %v1414
  %s1416 = scalar_lea.vmem %s7, 192
  %v1417 = vld [vmem:[%s1416] sm:$0xf]
  %v1418 = vld [vmem:[%s1416 + $0x4] sm:$0xf]
  %v1419 = vld [vmem:[%s1416 + $0x8] sm:$0xf]
  %v1420 = vld [vmem:[%s1416 + $0xc] sm:$0xf]
  %v1421 = vld [vmem:[%s1416 + $0x10] sm:$0xf]
  %v1422 = vld [vmem:[%s1416 + $0x14] sm:$0xf]
  %v1423 = vld [vmem:[%s1416 + $0x18] sm:$0xf]
  %v1424 = vld [vmem:[%s1416 + $0x1c] sm:$0xf]
  %v1425 = vld [vmem:[%s1416 + $0x20] sm:$0xf]
  %v1426 = vld [vmem:[%s1416 + $0x24] sm:$0xf]
  %v1427 = vld [vmem:[%s1416 + $0x28] sm:$0xf]
  %v1428 = vld [vmem:[%s1416 + $0x2c] sm:$0xf]
  %v1429 = vld [vmem:[%s1416 + $0x30] sm:$0xf]
  %v1430 = vld [vmem:[%s1416 + $0x34] sm:$0xf]
  %v1431 = vld [vmem:[%s1416 + $0x38] sm:$0xf]
  %v1432 = vld [vmem:[%s1416 + $0x3c] sm:$0xf]
  %s1433 = scalar_lea.vmem %s8, 12
  %v1434 = vld [vmem:[%s1433] sm:$0xf]
  %v1436 = vsel %vm1124, %v1434, 0
  %1438 = vmatpush.bf16.msra.mxu0 0
  %1439 = vmatpush.bf16.msra.mxu0 0
  %1440 = vmatpush.bf16.msra.mxu0 0
  %1441 = vmatpush.bf16.msra.mxu0 0
  %1442 = vmatpush.bf16.msra.mxu0 0
  %1443 = vmatpush.bf16.msra.mxu0 0
  %1444 = vmatpush.bf16.msra.mxu0 0
  %1445 = vmatpush.bf16.msra.mxu0 %v1436
  %1446 = vmatmul.bf16.gmra.mxu0 %v1122
  %v1447 = vpop.f32.mrf.mxu0
  %v1448 = vadd.f32 0.0, %v1447
  %v1449 = vpop.f32.mrf.mxu0
  %1450 = vdwg.mxu0
  %v1467 = vunpack.c.l.b16 %v1417
  %v1468 = vunpack.c.l.b16 %v1418
  %v1469 = vunpack.c.l.b16 %v1419
  %v1470 = vunpack.c.l.b16 %v1420
  %v1471 = vunpack.c.l.b16 %v1421
  %v1472 = vunpack.c.l.b16 %v1422
  %v1473 = vunpack.c.l.b16 %v1423
  %v1474 = vunpack.c.l.b16 %v1424
  %v1475 = vunpack.c.l.b16 %v1425
  %v1476 = vunpack.c.l.b16 %v1426
  %v1477 = vunpack.c.l.b16 %v1427
  %v1478 = vunpack.c.l.b16 %v1428
  %v1479 = vunpack.c.l.b16 %v1429
  %v1480 = vunpack.c.l.b16 %v1430
  %v1481 = vunpack.c.l.b16 %v1431
  %v1482 = vunpack.c.l.b16 %v1432
  %v1483 = vpack.c.b16 %v1468, %v1467
  %v1484 = vpack.c.b16 %v1470, %v1469
  %v1485 = vpack.c.b16 %v1472, %v1471
  %v1486 = vpack.c.b16 %v1474, %v1473
  %v1487 = vpack.c.b16 %v1476, %v1475
  %v1488 = vpack.c.b16 %v1478, %v1477
  %v1489 = vpack.c.b16 %v1480, %v1479
  %v1490 = vpack.c.b16 %v1482, %v1481
  %1499 = vmatpush.bf16.msra.mxu0 %v1490
  %1500 = vmatpush.bf16.msra.mxu0 %v1489
  %1501 = vmatpush.bf16.msra.mxu0 %v1488
  %1502 = vmatpush.bf16.msra.mxu0 %v1487
  %1503 = vmatpush.bf16.msra.mxu0 %v1486
  %1504 = vmatpush.bf16.msra.mxu0 %v1485
  %1505 = vmatpush.bf16.msra.mxu0 %v1484
  %1506 = vmatpush.bf16.msra.mxu0 %v1483
  %1507 = vmatmul.bf16.gmra.mxu0 %v1101
  %v1508 = vpop.f32.mrf.mxu0
  %v1509 = vadd.f32 %v1448, %v1508
  %v1510 = vpop.f32.mrf.mxu0
  %1511 = vdwg.mxu0
  %s1512 = scalar_lea.vmem %s9, 3
  %v1513 = vld [vmem:[%s1512] sm:$0x1]
  %v1515 = vperm.slane %v1513, 0
  %v1517 = vadd.f32 %v1509, %v1515
  %v1518 = vmax.f32 %v1517, 0.0
  %v1519 = vmax.f32 %v1415, %v1518
  %v1520 = vpack.c.bf16 %v1519, %v1519
  %v1521 = vld [vmem:[%s10] sm:$0xf]
  %v1522 = vld [vmem:[%s10 + $0x4] sm:$0xf]
  %v1523 = vld [vmem:[%s10 + $0x8] sm:$0xf]
  %v1524 = vld [vmem:[%s10 + $0xc] sm:$0xf]
  %v1525 = vld [vmem:[%s10 + $0x10] sm:$0xf]
  %v1526 = vld [vmem:[%s10 + $0x14] sm:$0xf]
  %v1527 = vld [vmem:[%s10 + $0x18] sm:$0xf]
  %v1528 = vld [vmem:[%s10 + $0x1c] sm:$0xf]
  %v1529 = vld [vmem:[%s11] sm:$0x1]
  %v1531 = vperm.slane %v1529, 0
  %v1541 = vunpack.c.l.b16 %v1521
  %v1542 = vunpack.c.l.b16 %v1522
  %v1543 = vunpack.c.l.b16 %v1523
  %v1544 = vunpack.c.l.b16 %v1524
  %v1545 = vunpack.c.l.b16 %v1525
  %v1546 = vunpack.c.l.b16 %v1526
  %v1547 = vunpack.c.l.b16 %v1527
  %v1548 = vunpack.c.l.b16 %v1528
  %v1549 = vpack.c.b16 %v1542, %v1541
  %v1550 = vpack.c.b16 %v1544, %v1543
  %v1551 = vpack.c.b16 %v1546, %v1545
  %v1552 = vpack.c.b16 %v1548, %v1547
  %vm1557 = vcmask 523264
  %v1559 = vsel %vm1557, %v1520, 0
  %1561 = vmatpush.bf16.msra.mxu0 0
  %1562 = vmatpush.bf16.msra.mxu0 0
  %1563 = vmatpush.bf16.msra.mxu0 0
  %1564 = vmatpush.bf16.msra.mxu0 0
  %1565 = vmatpush.bf16.msra.mxu0 %v1552
  %1566 = vmatpush.bf16.msra.mxu0 %v1551
  %1567 = vmatpush.bf16.msra.mxu0 %v1550
  %1568 = vmatpush.bf16.msra.mxu0 %v1549
  %1569 = vmatmul.bf16.gmra.mxu0 %v1559
  %v1570 = vpop.f32.mrf.mxu0
  %v1571 = vadd.f32 %v1531, %v1570
  %v1572 = vpop.f32.mrf.mxu0
  %1573 = vdwg.mxu0
  %1574 = vst [vmem:[%s12] sm:$0x3] %v1571
  // Predicated region
  $region50: #{critic_forward.1} parent=0 // pred_check
    _
  $region51: #{critic_forward.1} parent=0 // pred_check_branch
    %1576 = sbr.rel (0) target = $region53
  $region52: #{critic_forward.1} parent=0 // pred_region
    _
  $region53: #{critic_forward.1} parent=0 // pred_fallthru
    _
  // Predicated region
  $region54: #{critic_forward.1} parent=0 // pred_check
    _
  $region55: #{critic_forward.1} parent=0 // pred_check_branch
    %1578 = sbr.rel (0) target = $region57
  $region56: #{critic_forward.1} parent=0 // pred_region
    _
  $region57: #{critic_forward.1} parent=0 // pred_fallthru
    _

</llo_original>
